<compile_context>
chip_gen: v7x
topology: tpu7x:2x2x1
jax: 0.10.0
libtpu: 0.0.40
codegen_flags: <defaults>
</compile_context>

<pallas_src>
import functools

import numpy as np
import jax
import jax.numpy as jnp
from jax import lax
from jax.experimental import pallas as pl
from jax.experimental.pallas import tpu as pltpu


# ----------------------------------------------------------------------------------
# Fused kernel: cam_init + pose init + n_iter HMRLayer refinements + rotation_6d_to_matrix
# ----------------------------------------------------------------------------------
def _hmr_kernel(n_iter,
                feat_ref,                 # (TB, F) f32
                wbig_ref, bbig_ref,       # (F, 256) cdt / (1, 256) f32: fused [hidden | state] weight
                w1s_ref,                  # (128, 128) cdt: packed [pose|cam|shape] -> hidden
                w2_ref, b2_ref,           # (128, 128) cdt / (1, 128) f32
                wd_ref, bd_ref,           # (128, 128) cdt / (1, 128) f32: packed decoder
                gmat_ref,                 # (128, 768) cdt: gather pose lanes -> component groups
                smat_ref,                 # (1152, 256) cdt: scatter components -> (16,3,3), padded lanes
                state_out_ref,            # (TB, 128) f32
                rot_out_ref):             # (TB, 256) f32
    f32 = jnp.float32
    cdt = wbig_ref.dtype                  # MXU operand dtype (bf16 or f32); accum is always f32

    # in-kernel cast of the per-tile feat block (no standalone host-side astype pass)
    feat = feat_ref[...].astype(cdt)

    # ---- ONE fused feat matmul: lanes [0:128) = feat@w1_feat + b1,
    #      lanes [128:256) = state slab init (pose_6d init + cam_init(feat) in both slots) ----
    big = jnp.dot(feat, wbig_ref[...], preferred_element_type=f32) + bbig_ref[...]
    h_feat = big[:, 0:128]                 # loop-invariant feat contribution (hoisted)
    state = big[:, 128:256]                # (TB, 128) f32 state slab

    w1s = w1s_ref[...]
    w2 = w2_ref[...]
    b2 = b2_ref[...]
    wd = wd_ref[...]
    bd = bd_ref[...]

    # ---- HMRLayer refinement (Dropout = identity in eval); residuals stay f32 ----------
    for _ in range(n_iter):
        h = jnp.maximum(h_feat + jnp.dot(state.astype(cdt), w1s,
                                         preferred_element_type=f32), 0.0)
        h = jnp.maximum(jnp.dot(h.astype(cdt), w2, preferred_element_type=f32) + b2, 0.0)
        state = state + jnp.dot(h.astype(cdt), wd, preferred_element_type=f32) + bd

    state_out_ref[...] = state             # lane-dense 128-wide store

    # ---- fused rotation_6d_to_matrix (pytorch3d semantics, eps = 1e-12) -----------------
    # gather matmul: component j of joint k (state lane 6k+j) -> lane 128j+k
    grouped = jnp.dot(state.astype(cdt), gmat_ref[...], preferred_element_type=f32)  # (TB,768)
    a1x = grouped[:, 0:128]
    a1y = grouped[:, 128:256]
    a1z = grouped[:, 256:384]
    a2x = grouped[:, 384:512]
    a2y = grouped[:, 512:640]
    a2z = grouped[:, 640:768]

    eps2 = 1e-24  # (1e-12)**2 ; rsqrt(max(sumsq, eps^2)) == 1/max(norm, eps)
    inv_n1 = lax.rsqrt(jnp.maximum(a1x * a1x + a1y * a1y + a1z * a1z, eps2))
    b1x, b1y, b1z = a1x * inv_n1, a1y * inv_n1, a1z * inv_n1
    d = b1x * a2x + b1y * a2y + b1z * a2z
    u2x, u2y, u2z = a2x - d * b1x, a2y - d * b1y, a2z - d * b1z
    inv_n2 = lax.rsqrt(jnp.maximum(u2x * u2x + u2y * u2y + u2z * u2z, eps2))
    b2x, b2y, b2z = u2x * inv_n2, u2y * inv_n2, u2z * inv_n2
    b3x = b1y * b2z - b1z * b2y
    b3y = b1z * b2x - b1x * b2z
    b3z = b1x * b2y - b1y * b2x

    # ONE scatter matmul over the concatenated components (MXU accumulates across K-tiles)
    comps = jnp.concatenate([b1x, b1y, b1z, b2x, b2y, b2z, b3x, b3y, b3z], axis=-1)  # (TB,1152)
    rot_out_ref[...] = jnp.dot(comps.astype(cdt), smat_ref[...],
                               preferred_element_type=f32)          # lane-dense 256-wide store


# ----------------------------------------------------------------------------------
# Constant gather / scatter permutation matrices for the fused rot6d (0/1 -> exact in bf16)
# ----------------------------------------------------------------------------------
def _rot6d_constants(dtype):
    gmat = np.zeros((128, 6 * 128), np.float32)
    for k in range(16):
        for j in range(6):
            gmat[6 * k + j, 128 * j + k] = 1.0           # rows 96:128 stay zero
    smat = np.zeros((9 * 128, 256), np.float32)           # cols 144:256 zero -> lane-dense store
    for m in range(9):
        for k in range(16):
            smat[128 * m + k, 9 * k + m] = 1.0
    return jnp.asarray(gmat, dtype), jnp.asarray(smat, dtype)


# ----------------------------------------------------------------------------------
# Parameter packing (call ONCE when params are static across forwards, then reuse)
# ----------------------------------------------------------------------------------
def pack_hand_hmr_params(params, feat_dim, use_bf16=True):
    f32 = jnp.float32
    cdt = jnp.bfloat16 if use_bf16 else f32
    F = feat_dim

    # fused feat weight: cols [0:128) hidden (w1_feat padded 126->128),
    # cols [128:256) state slab (cam at 224:227 live and 237:240 init copy)
    wbig = jnp.zeros((F, 256), f32)
    wbig = wbig.at[:, 0:126].set(params["w1_feat"])
    wbig = wbig.at[:, 128 + 96:128 + 99].set(params["w_cam"])
    wbig = wbig.at[:, 128 + 109:128 + 112].set(params["w_cam"])

    # fused bias: b1 | pose_6d init pattern + cam bias (both slots)
    bbig = jnp.zeros((1, 256), f32)
    bbig = bbig.at[:, 0:126].set(params["b1"].reshape(1, 126))
    pose_init = jnp.tile(jnp.array([1., 0., 0., 0., 1., 0.], f32), 16).reshape(1, 96)
    bbig = bbig.at[:, 128:128 + 96].set(pose_init)
    bbig = bbig.at[:, 128 + 96:128 + 99].set(params["b_cam"].reshape(1, 3))
    bbig = bbig.at[:, 128 + 109:128 + 112].set(params["b_cam"].reshape(1, 3))

    w1s = jnp.zeros((128, 128), f32)
    w1s = w1s.at[0:96, :126].set(params["w1_pose"])
    w1s = w1s.at[96:99, :126].set(params["w1_cam"])
    w1s = w1s.at[99:109, :126].set(params["w1_shape"])

    w2 = jnp.zeros((128, 128), f32).at[:126, :126].set(params["w2"])
    b2 = jnp.zeros((1, 128), f32).at[:, :126].set(params["b2"].reshape(1, 126))

    wd = jnp.zeros((128, 128), f32)
    wd = wd.at[:126, 0:96].set(params["wd_pose"])
    wd = wd.at[:126, 96:99].set(params["wd_cam"])
    wd = wd.at[:126, 99:109].set(params["wd_shape"])
    bd = jnp.zeros((1, 128), f32)
    bd = bd.at[:, 0:96].set(params["bd_pose"].reshape(1, 96))
    bd = bd.at[:, 96:99].set(params["bd_cam"].reshape(1, 3))
    bd = bd.at[:, 99:109].set(params["bd_shape"].reshape(1, 10))

    gmat, smat = _rot6d_constants(cdt)
    # NOTE: with use_bf16=True the cam columns ride in the bf16 fused matmul (f32 accum);
    # use_bf16=False keeps every operand f32-exact.
    return (wbig.astype(cdt), bbig, w1s.astype(cdt), w2.astype(cdt), b2,
            wd.astype(cdt), bd, gmat, smat)


# ----------------------------------------------------------------------------------
# Batch tiling: 8-aligned tiles, capped at 512 (fits v7x 32 MiB scoped VMEM, keeps grid>=2
# for megacore on large batches); non-divisible B is padded up and outputs sliced.
# ----------------------------------------------------------------------------------
def _round_up(x, m):
    return (x + m - 1) // m * m


def _choose_tile(batch, max_tb=512):
    if batch <= max_tb:
        tb = _round_up(batch, 8)
        return tb, tb
    n_steps = -(-batch // max_tb)
    tb = _round_up(-(-batch // n_steps), 8)
    return tb, tb * n_steps


# ----------------------------------------------------------------------------------
# Wrapper (packing is hoisted out; pass the packed tuple in)
# ----------------------------------------------------------------------------------
@functools.partial(jax.jit, static_argnames=("n_iter",))
def hand_hmr_forward(feat, packed, n_iter):
    """HandHMR.forward(feat, use_pool=False) equivalent."""
    B, F = feat.shape
    tb, Bp = _choose_tile(B)
    if Bp != B:
        feat = jnp.pad(feat, ((0, Bp - B), (0, 0)))
    grid = (Bp // tb,)

    def resident(a):  # weights: same block every grid step -> stays VMEM-resident
        return pl.BlockSpec(a.shape, lambda i: (0, 0))

    in_specs = [pl.BlockSpec((tb, F), lambda i: (i, 0))]
    in_specs += [resident(a) for a in packed]

    out_specs = (
        pl.BlockSpec((tb, 128), lambda i: (i, 0)),
        pl.BlockSpec((tb, 256), lambda i: (i, 0)),
    )
    out_shapes = (
        jax.ShapeDtypeStruct((Bp, 128), jnp.float32),   # packed state slab
        jax.ShapeDtypeStruct((Bp, 256), jnp.float32),   # rotmats (first 144 lanes live)
    )

    state, rot = pl.pallas_call(
        functools.partial(_hmr_kernel, n_iter),
        grid=grid,
        in_specs=in_specs,
        out_specs=out_specs,
        out_shape=out_shapes,
        compiler_params=pltpu.CompilerParams(dimension_semantics=("parallel",)),
    )(feat, *packed)

    # keys already with '/' replaced by '.' (xdict.replace_keys)
    return {
        "pose_6d": state[:B, 0:96],
        "shape": state[:B, 99:109],
        "cam_t.wp": state[:B, 96:99],
        "pose": rot[:B, 0:144].reshape(B, 16, 3, 3),
        "cam_t.wp.init": state[:B, 109:112],
    }


# ----------------------------------------------------------------------------------
# Deterministic parameter construction (synthetic weights; shapes from __init__)
# ----------------------------------------------------------------------------------
def make_params(key, feat_dim):
    hmr_dim = feat_dim + 96 + 3 + 10   # feat_dim + 109
    mid = 126
    ks = jax.random.split(key, 16)
    n = lambda k, s, sc: (jax.random.normal(k, s, jnp.float32) * sc)
    w1 = n(ks[0], (hmr_dim, mid), 0.05)
    return {
        "w_cam":    n(ks[1], (feat_dim, 3), 0.05),
        "b_cam":    n(ks[2], (1, 3), 0.01),
        "w1_feat":  w1[:feat_dim],
        "w1_pose":  w1[feat_dim:feat_dim + 96],
        "w1_cam":   w1[feat_dim + 96:feat_dim + 99],
        "w1_shape": w1[feat_dim + 99:],
        "b1":       n(ks[3], (1, mid), 0.01),
        "w2":       n(ks[4], (mid, mid), 0.05),
        "b2":       n(ks[5], (1, mid), 0.01),
        "wd_pose":  n(ks[6], (mid, 96), 0.01),
        "bd_pose":  jnp.zeros((1, 96), jnp.float32),
        "wd_cam":   n(ks[7], (mid, 3), 0.01),
        "bd_cam":   jnp.zeros((1, 3), jnp.float32),
        "wd_shape": n(ks[8], (mid, 10), 0.01),
        "bd_shape": jnp.zeros((1, 10), jnp.float32),
    }


# ----------------------------------------------------------------------------------
# Pure-JAX reference (for sanity check)
# ----------------------------------------------------------------------------------
def reference_forward(feat, params, n_iter):
    B = feat.shape[0]
    cam = feat @ params["w_cam"] + params["b_cam"]
    cam_init = cam
    pose = jnp.tile(jnp.array([1., 0., 0., 0., 1., 0.], jnp.float32), 16)[None].repeat(B, 0)
    shp = jnp.zeros((B, 10), jnp.float32)
    w1 = jnp.concatenate([params["w1_feat"], params["w1_pose"],
                          params["w1_cam"], params["w1_shape"]], axis=0)
    for _ in range(n_iter):
        state = jnp.concatenate([feat, pose, cam, shp], axis=1)
        h = jnp.maximum(state @ w1 + params["b1"], 0.0)
        h = jnp.maximum(h @ params["w2"] + params["b2"], 0.0)
        pose = pose + h @ params["wd_pose"] + params["bd_pose"]
        cam = cam + h @ params["wd_cam"] + params["bd_cam"]
        shp = shp + h @ params["wd_shape"] + params["bd_shape"]
    d6 = pose.reshape(-1, 6)
    a1, a2 = d6[:, :3], d6[:, 3:]
    b1 = a1 / jnp.maximum(jnp.linalg.norm(a1, axis=-1, keepdims=True), 1e-12)
    b2 = a2 - jnp.sum(b1 * a2, -1, keepdims=True) * b1
    b2 = b2 / jnp.maximum(jnp.linalg.norm(b2, axis=-1, keepdims=True), 1e-12)
    b3 = jnp.cross(b1, b2)
    rot = jnp.stack([b1, b2, b3], axis=-2).reshape(B, 16, 3, 3)
    return {"pose_6d": pose, "shape": shp, "cam_t.wp": cam,
            "pose": rot, "cam_t.wp.init": cam_init}


# TODO(synk): the `use_pool=True` path (AdaptiveAvgPool2d over NCHW feature maps) is not
# exercised by this forward (use_pool defaults to False and is unused in the given code).

if __name__ == "__main__":
    key = jax.random.PRNGKey(0)
    B, FEAT_DIM, N_ITER = 2, 32, 3

    k_feat, k_par = jax.random.split(key)
    feat = jax.random.normal(k_feat, (B, FEAT_DIM), jnp.float32)
    params = make_params(k_par, FEAT_DIM)

    ref = reference_forward(feat, params, N_ITER)

    # f32-operand path: tight tolerance
    packed_f32 = pack_hand_hmr_params(params, FEAT_DIM, use_bf16=False)
    out = hand_hmr_forward(feat, packed_f32, n_iter=N_ITER)
    out = jax.tree_util.tree_map(jax.block_until_ready, out)
    for k in ref:
        assert out[k].shape == ref[k].shape, (k, out[k].shape, ref[k].shape)
        assert jnp.allclose(out[k], ref[k], rtol=1e-2, atol=1e-2), k

    # bf16-operand / f32-accumulation path (the perf configuration): loose tolerance
    packed_bf16 = pack_hand_hmr_params(params, FEAT_DIM, use_bf16=True)
    out_bf = hand_hmr_forward(feat, packed_bf16, n_iter=N_ITER)
    out_bf = jax.tree_util.tree_map(jax.block_until_ready, out_bf)
    for k in ref:
        assert out_bf[k].shape == ref[k].shape, k
        assert jnp.allclose(out_bf[k], ref[k], rtol=5e-2, atol=5e-2), k

    print("KERNEL_OK")
</pallas_src>

<mosaic_0001>
module attributes {stable_mosaic.version = 11 : i64} {
  func.func @_hmr_kernel(%arg0: i32, %arg1: memref<8x32xf32, #tpu.memory_space<vmem>>, %arg2: memref<32x256xf32, #tpu.memory_space<vmem>>, %arg3: memref<1x256xf32, #tpu.memory_space<vmem>>, %arg4: memref<128x128xf32, #tpu.memory_space<vmem>>, %arg5: memref<128x128xf32, #tpu.memory_space<vmem>>, %arg6: memref<1x128xf32, #tpu.memory_space<vmem>>, %arg7: memref<128x128xf32, #tpu.memory_space<vmem>>, %arg8: memref<1x128xf32, #tpu.memory_space<vmem>>, %arg9: memref<128x768xf32, #tpu.memory_space<vmem>>, %arg10: memref<1152x256xf32, #tpu.memory_space<vmem>>, %arg11: memref<8x128xf32, #tpu.memory_space<vmem>>, %arg12: memref<8x256xf32, #tpu.memory_space<vmem>>) attributes {dimension_semantics = [#tpu.dimension_semantics<parallel>], iteration_bounds = array<i64: 1>, scalar_prefetch = 0 : i64, scratch_operands = 0 : i64, tpu.core_type = #tpu.core_type<tc>, window_params = [{transform_indices = @transform_0, window_bounds = array<i64: 8, 32>}, {pipeline_mode = #tpu.pipeline_mode<synchronous>, transform_indices = @transform_1, window_bounds = array<i64: 32, 256>}, {pipeline_mode = #tpu.pipeline_mode<synchronous>, transform_indices = @transform_2, window_bounds = array<i64: 1, 256>}, {pipeline_mode = #tpu.pipeline_mode<synchronous>, transform_indices = @transform_3, window_bounds = array<i64: 128, 128>}, {pipeline_mode = #tpu.pipeline_mode<synchronous>, transform_indices = @transform_4, window_bounds = array<i64: 128, 128>}, {pipeline_mode = #tpu.pipeline_mode<synchronous>, transform_indices = @transform_5, window_bounds = array<i64: 1, 128>}, {pipeline_mode = #tpu.pipeline_mode<synchronous>, transform_indices = @transform_6, window_bounds = array<i64: 128, 128>}, {pipeline_mode = #tpu.pipeline_mode<synchronous>, transform_indices = @transform_7, window_bounds = array<i64: 1, 128>}, {pipeline_mode = #tpu.pipeline_mode<synchronous>, transform_indices = @transform_8, window_bounds = array<i64: 128, 768>}, {pipeline_mode = #tpu.pipeline_mode<synchronous>, transform_indices = @transform_9, window_bounds = array<i64: 1152, 256>}, {transform_indices = @transform_10, window_bounds = array<i64: 8, 128>}, {transform_indices = @transform_11, window_bounds = array<i64: 8, 256>}]} {
    %c0 = arith.constant 0 : index
    %c0_0 = arith.constant 0 : index
    %0 = vector.load %arg1[%c0, %c0_0] : memref<8x32xf32, #tpu.memory_space<vmem>>, vector<8x32xf32>
    %c0_1 = arith.constant 0 : index
    %c0_2 = arith.constant 0 : index
    %1 = vector.load %arg2[%c0_1, %c0_2] : memref<32x256xf32, #tpu.memory_space<vmem>>, vector<32x256xf32>
    %cst = arith.constant dense<0.000000e+00> : vector<8x256xf32>
    %2 = tpu.matmul %0, %1, %cst {dimension_numbers = #tpu.dot_dimension_numbers<[1], [0], [0], [1], [0, 0, 1, 1], [], []>} : vector<8x32xf32>, vector<32x256xf32>, vector<8x256xf32> -> vector<8x256xf32>
    %c0_3 = arith.constant 0 : index
    %c0_4 = arith.constant 0 : index
    %3 = vector.load %arg3[%c0_3, %c0_4] : memref<1x256xf32, #tpu.memory_space<vmem>>, vector<1x256xf32>
    %4 = vector.broadcast %3 : vector<1x256xf32> to vector<8x256xf32>
    %5 = arith.addf %2, %4 : vector<8x256xf32>
    %6 = vector.extract_strided_slice %5 {offsets = [0, 0], sizes = [8, 128], strides = [1, 1]} : vector<8x256xf32> to vector<8x128xf32>
    %7 = vector.extract_strided_slice %5 {offsets = [0, 128], sizes = [8, 128], strides = [1, 1]} : vector<8x256xf32> to vector<8x128xf32>
    %c0_5 = arith.constant 0 : index
    %c0_6 = arith.constant 0 : index
    %8 = vector.load %arg4[%c0_5, %c0_6] : memref<128x128xf32, #tpu.memory_space<vmem>>, vector<128x128xf32>
    %c0_7 = arith.constant 0 : index
    %c0_8 = arith.constant 0 : index
    %9 = vector.load %arg5[%c0_7, %c0_8] : memref<128x128xf32, #tpu.memory_space<vmem>>, vector<128x128xf32>
    %c0_9 = arith.constant 0 : index
    %c0_10 = arith.constant 0 : index
    %10 = vector.load %arg6[%c0_9, %c0_10] : memref<1x128xf32, #tpu.memory_space<vmem>>, vector<1x128xf32>
    %c0_11 = arith.constant 0 : index
    %c0_12 = arith.constant 0 : index
    %11 = vector.load %arg7[%c0_11, %c0_12] : memref<128x128xf32, #tpu.memory_space<vmem>>, vector<128x128xf32>
    %c0_13 = arith.constant 0 : index
    %c0_14 = arith.constant 0 : index
    %12 = vector.load %arg8[%c0_13, %c0_14] : memref<1x128xf32, #tpu.memory_space<vmem>>, vector<1x128xf32>
    %cst_15 = arith.constant dense<0.000000e+00> : vector<8x128xf32>
    %13 = tpu.matmul %7, %8, %cst_15 {dimension_numbers = #tpu.dot_dimension_numbers<[1], [0], [0], [1], [0, 0, 1, 1], [], []>} : vector<8x128xf32>, vector<128x128xf32>, vector<8x128xf32> -> vector<8x128xf32>
    %14 = arith.addf %6, %13 : vector<8x128xf32>
    %cst_16 = arith.constant 0.000000e+00 : f32
    %15 = vector.broadcast %cst_16 : f32 to vector<8x128xf32>
    %16 = arith.maximumf %14, %15 : vector<8x128xf32>
    %cst_17 = arith.constant dense<0.000000e+00> : vector<8x128xf32>
    %17 = tpu.matmul %16, %9, %cst_17 {dimension_numbers = #tpu.dot_dimension_numbers<[1], [0], [0], [1], [0, 0, 1, 1], [], []>} : vector<8x128xf32>, vector<128x128xf32>, vector<8x128xf32> -> vector<8x128xf32>
    %18 = vector.broadcast %10 : vector<1x128xf32> to vector<8x128xf32>
    %19 = arith.addf %17, %18 : vector<8x128xf32>
    %cst_18 = arith.constant 0.000000e+00 : f32
    %20 = vector.broadcast %cst_18 : f32 to vector<8x128xf32>
    %21 = arith.maximumf %19, %20 : vector<8x128xf32>
    %cst_19 = arith.constant dense<0.000000e+00> : vector<8x128xf32>
    %22 = tpu.matmul %21, %11, %cst_19 {dimension_numbers = #tpu.dot_dimension_numbers<[1], [0], [0], [1], [0, 0, 1, 1], [], []>} : vector<8x128xf32>, vector<128x128xf32>, vector<8x128xf32> -> vector<8x128xf32>
    %23 = arith.addf %7, %22 : vector<8x128xf32>
    %24 = vector.broadcast %12 : vector<1x128xf32> to vector<8x128xf32>
    %25 = arith.addf %23, %24 : vector<8x128xf32>
    %cst_20 = arith.constant dense<0.000000e+00> : vector<8x128xf32>
    %26 = tpu.matmul %25, %8, %cst_20 {dimension_numbers = #tpu.dot_dimension_numbers<[1], [0], [0], [1], [0, 0, 1, 1], [], []>} : vector<8x128xf32>, vector<128x128xf32>, vector<8x128xf32> -> vector<8x128xf32>
    %27 = arith.addf %6, %26 : vector<8x128xf32>
    %cst_21 = arith.constant 0.000000e+00 : f32
    %28 = vector.broadcast %cst_21 : f32 to vector<8x128xf32>
    %29 = arith.maximumf %27, %28 : vector<8x128xf32>
    %cst_22 = arith.constant dense<0.000000e+00> : vector<8x128xf32>
    %30 = tpu.matmul %29, %9, %cst_22 {dimension_numbers = #tpu.dot_dimension_numbers<[1], [0], [0], [1], [0, 0, 1, 1], [], []>} : vector<8x128xf32>, vector<128x128xf32>, vector<8x128xf32> -> vector<8x128xf32>
    %31 = vector.broadcast %10 : vector<1x128xf32> to vector<8x128xf32>
    %32 = arith.addf %30, %31 : vector<8x128xf32>
    %cst_23 = arith.constant 0.000000e+00 : f32
    %33 = vector.broadcast %cst_23 : f32 to vector<8x128xf32>
    %34 = arith.maximumf %32, %33 : vector<8x128xf32>
    %cst_24 = arith.constant dense<0.000000e+00> : vector<8x128xf32>
    %35 = tpu.matmul %34, %11, %cst_24 {dimension_numbers = #tpu.dot_dimension_numbers<[1], [0], [0], [1], [0, 0, 1, 1], [], []>} : vector<8x128xf32>, vector<128x128xf32>, vector<8x128xf32> -> vector<8x128xf32>
    %36 = arith.addf %25, %35 : vector<8x128xf32>
    %37 = vector.broadcast %12 : vector<1x128xf32> to vector<8x128xf32>
    %38 = arith.addf %36, %37 : vector<8x128xf32>
    %cst_25 = arith.constant dense<0.000000e+00> : vector<8x128xf32>
    %39 = tpu.matmul %38, %8, %cst_25 {dimension_numbers = #tpu.dot_dimension_numbers<[1], [0], [0], [1], [0, 0, 1, 1], [], []>} : vector<8x128xf32>, vector<128x128xf32>, vector<8x128xf32> -> vector<8x128xf32>
    %40 = arith.addf %6, %39 : vector<8x128xf32>
    %cst_26 = arith.constant 0.000000e+00 : f32
    %41 = vector.broadcast %cst_26 : f32 to vector<8x128xf32>
    %42 = arith.maximumf %40, %41 : vector<8x128xf32>
    %cst_27 = arith.constant dense<0.000000e+00> : vector<8x128xf32>
    %43 = tpu.matmul %42, %9, %cst_27 {dimension_numbers = #tpu.dot_dimension_numbers<[1], [0], [0], [1], [0, 0, 1, 1], [], []>} : vector<8x128xf32>, vector<128x128xf32>, vector<8x128xf32> -> vector<8x128xf32>
    %44 = vector.broadcast %10 : vector<1x128xf32> to vector<8x128xf32>
    %45 = arith.addf %43, %44 : vector<8x128xf32>
    %cst_28 = arith.constant 0.000000e+00 : f32
    %46 = vector.broadcast %cst_28 : f32 to vector<8x128xf32>
    %47 = arith.maximumf %45, %46 : vector<8x128xf32>
    %cst_29 = arith.constant dense<0.000000e+00> : vector<8x128xf32>
    %48 = tpu.matmul %47, %11, %cst_29 {dimension_numbers = #tpu.dot_dimension_numbers<[1], [0], [0], [1], [0, 0, 1, 1], [], []>} : vector<8x128xf32>, vector<128x128xf32>, vector<8x128xf32> -> vector<8x128xf32>
    %49 = arith.addf %38, %48 : vector<8x128xf32>
    %50 = vector.broadcast %12 : vector<1x128xf32> to vector<8x128xf32>
    %51 = arith.addf %49, %50 : vector<8x128xf32>
    %c0_30 = arith.constant 0 : index
    %c0_31 = arith.constant 0 : index
    %52 = vector.load %arg11[%c0_30, %c0_31] : memref<8x128xf32, #tpu.memory_space<vmem>>, vector<8x128xf32>
    tpu.vector_store %arg11[%c0_30, %c0_31], %51 {strides = array<i32>} : memref<8x128xf32, #tpu.memory_space<vmem>>, vector<8x128xf32>,
    %c0_32 = arith.constant 0 : index
    %c0_33 = arith.constant 0 : index
    %53 = vector.load %arg9[%c0_32, %c0_33] : memref<128x768xf32, #tpu.memory_space<vmem>>, vector<128x768xf32>
    %cst_34 = arith.constant dense<0.000000e+00> : vector<8x768xf32>
    %54 = tpu.matmul %51, %53, %cst_34 {dimension_numbers = #tpu.dot_dimension_numbers<[1], [0], [0], [1], [0, 0, 1, 1], [], []>} : vector<8x128xf32>, vector<128x768xf32>, vector<8x768xf32> -> vector<8x768xf32>
    %55 = vector.extract_strided_slice %54 {offsets = [0, 0], sizes = [8, 128], strides = [1, 1]} : vector<8x768xf32> to vector<8x128xf32>
    %56 = vector.extract_strided_slice %54 {offsets = [0, 128], sizes = [8, 128], strides = [1, 1]} : vector<8x768xf32> to vector<8x128xf32>
    %57 = vector.extract_strided_slice %54 {offsets = [0, 256], sizes = [8, 128], strides = [1, 1]} : vector<8x768xf32> to vector<8x128xf32>
    %58 = vector.extract_strided_slice %54 {offsets = [0, 384], sizes = [8, 128], strides = [1, 1]} : vector<8x768xf32> to vector<8x128xf32>
    %59 = vector.extract_strided_slice %54 {offsets = [0, 512], sizes = [8, 128], strides = [1, 1]} : vector<8x768xf32> to vector<8x128xf32>
    %60 = vector.extract_strided_slice %54 {offsets = [0, 640], sizes = [8, 128], strides = [1, 1]} : vector<8x768xf32> to vector<8x128xf32>
    %61 = arith.mulf %55, %55 : vector<8x128xf32>
    %62 = arith.mulf %56, %56 : vector<8x128xf32>
    %63 = arith.addf %61, %62 : vector<8x128xf32>
    %64 = arith.mulf %57, %57 : vector<8x128xf32>
    %65 = arith.addf %63, %64 : vector<8x128xf32>
    %cst_35 = arith.constant 1.000000e-24 : f32
    %66 = vector.broadcast %cst_35 : f32 to vector<8x128xf32>
    %67 = arith.maximumf %65, %66 : vector<8x128xf32>
    %68 = math.rsqrt %67 : vector<8x128xf32>
    %69 = arith.mulf %55, %68 : vector<8x128xf32>
    %70 = arith.mulf %56, %68 : vector<8x128xf32>
    %71 = arith.mulf %57, %68 : vector<8x128xf32>
    %72 = arith.mulf %69, %58 : vector<8x128xf32>
    %73 = arith.mulf %70, %59 : vector<8x128xf32>
    %74 = arith.addf %72, %73 : vector<8x128xf32>
    %75 = arith.mulf %71, %60 : vector<8x128xf32>
    %76 = arith.addf %74, %75 : vector<8x128xf32>
    %77 = arith.mulf %76, %69 : vector<8x128xf32>
    %78 = arith.subf %58, %77 : vector<8x128xf32>
    %79 = arith.mulf %76, %70 : vector<8x128xf32>
    %80 = arith.subf %59, %79 : vector<8x128xf32>
    %81 = arith.mulf %76, %71 : vector<8x128xf32>
    %82 = arith.subf %60, %81 : vector<8x128xf32>
    %83 = arith.mulf %78, %78 : vector<8x128xf32>
    %84 = arith.mulf %80, %80 : vector<8x128xf32>
    %85 = arith.addf %83, %84 : vector<8x128xf32>
    %86 = arith.mulf %82, %82 : vector<8x128xf32>
    %87 = arith.addf %85, %86 : vector<8x128xf32>
    %cst_36 = arith.constant 1.000000e-24 : f32
    %88 = vector.broadcast %cst_36 : f32 to vector<8x128xf32>
    %89 = arith.maximumf %87, %88 : vector<8x128xf32>
    %90 = math.rsqrt %89 : vector<8x128xf32>
    %91 = arith.mulf %78, %90 : vector<8x128xf32>
    %92 = arith.mulf %80, %90 : vector<8x128xf32>
    %93 = arith.mulf %82, %90 : vector<8x128xf32>
    %94 = arith.mulf %70, %93 : vector<8x128xf32>
    %95 = arith.mulf %71, %92 : vector<8x128xf32>
    %96 = arith.subf %94, %95 : vector<8x128xf32>
    %97 = arith.mulf %71, %91 : vector<8x128xf32>
    %98 = arith.mulf %69, %93 : vector<8x128xf32>
    %99 = arith.subf %97, %98 : vector<8x128xf32>
    %100 = arith.mulf %69, %92 : vector<8x128xf32>
    %101 = arith.mulf %70, %91 : vector<8x128xf32>
    %102 = arith.subf %100, %101 : vector<8x128xf32>
    %103 = tpu.concatenate %69, %70, %71, %91, %92, %93, %96, %99, %102 in 1 : vector<8x128xf32>, vector<8x128xf32>, vector<8x128xf32>, vector<8x128xf32>, vector<8x128xf32>, vector<8x128xf32>, vector<8x128xf32>, vector<8x128xf32>, vector<8x128xf32> -> vector<8x1152xf32>
    %c0_37 = arith.constant 0 : index
    %c0_38 = arith.constant 0 : index
    %104 = vector.load %arg10[%c0_37, %c0_38] : memref<1152x256xf32, #tpu.memory_space<vmem>>, vector<1152x256xf32>
    %cst_39 = arith.constant dense<0.000000e+00> : vector<8x256xf32>
    %105 = tpu.matmul %103, %104, %cst_39 {dimension_numbers = #tpu.dot_dimension_numbers<[1], [0], [0], [1], [0, 0, 1, 1], [], []>} : vector<8x1152xf32>, vector<1152x256xf32>, vector<8x256xf32> -> vector<8x256xf32>
    %c0_40 = arith.constant 0 : index
    %c0_41 = arith.constant 0 : index
    %106 = vector.load %arg12[%c0_40, %c0_41] : memref<8x256xf32, #tpu.memory_space<vmem>>, vector<8x256xf32>
    tpu.vector_store %arg12[%c0_40, %c0_41], %105 {strides = array<i32>} : memref<8x256xf32, #tpu.memory_space<vmem>>, vector<8x256xf32>,
    return
  }
  func.func @transform_0(%arg0: i32) -> (i32, i32) {
    %c0_i32 = arith.constant 0 : i32
    %c0_i32_0 = arith.constant 0 : i32
    return %arg0, %c0_i32 : i32, i32
  }
  func.func @transform_1(%arg0: i32) -> (i32, i32) {
    %c0_i32 = arith.constant 0 : i32
    %c0_i32_0 = arith.constant 0 : i32
    %c0_i32_1 = arith.constant 0 : i32
    return %c0_i32, %c0_i32_0 : i32, i32
  }
  func.func @transform_2(%arg0: i32) -> (i32, i32) {
    %c0_i32 = arith.constant 0 : i32
    %c0_i32_0 = arith.constant 0 : i32
    %c0_i32_1 = arith.constant 0 : i32
    return %c0_i32, %c0_i32_0 : i32, i32
  }
  func.func @transform_3(%arg0: i32) -> (i32, i32) {
    %c0_i32 = arith.constant 0 : i32
    %c0_i32_0 = arith.constant 0 : i32
    %c0_i32_1 = arith.constant 0 : i32
    return %c0_i32, %c0_i32_0 : i32, i32
  }
  func.func @transform_4(%arg0: i32) -> (i32, i32) {
    %c0_i32 = arith.constant 0 : i32
    %c0_i32_0 = arith.constant 0 : i32
    %c0_i32_1 = arith.constant 0 : i32
    return %c0_i32, %c0_i32_0 : i32, i32
  }
  func.func @transform_5(%arg0: i32) -> (i32, i32) {
    %c0_i32 = arith.constant 0 : i32
    %c0_i32_0 = arith.constant 0 : i32
    %c0_i32_1 = arith.constant 0 : i32
    return %c0_i32, %c0_i32_0 : i32, i32
  }
  func.func @transform_6(%arg0: i32) -> (i32, i32) {
    %c0_i32 = arith.constant 0 : i32
    %c0_i32_0 = arith.constant 0 : i32
    %c0_i32_1 = arith.constant 0 : i32
    return %c0_i32, %c0_i32_0 : i32, i32
  }
  func.func @transform_7(%arg0: i32) -> (i32, i32) {
    %c0_i32 = arith.constant 0 : i32
    %c0_i32_0 = arith.constant 0 : i32
    %c0_i32_1 = arith.constant 0 : i32
    return %c0_i32, %c0_i32_0 : i32, i32
  }
  func.func @transform_8(%arg0: i32) -> (i32, i32) {
    %c0_i32 = arith.constant 0 : i32
    %c0_i32_0 = arith.constant 0 : i32
    %c0_i32_1 = arith.constant 0 : i32
    return %c0_i32, %c0_i32_0 : i32, i32
  }
  func.func @transform_9(%arg0: i32) -> (i32, i32) {
    %c0_i32 = arith.constant 0 : i32
    %c0_i32_0 = arith.constant 0 : i32
    %c0_i32_1 = arith.constant 0 : i32
    return %c0_i32, %c0_i32_0 : i32, i32
  }
  func.func @transform_10(%arg0: i32) -> (i32, i32) {
    %c0_i32 = arith.constant 0 : i32
    %c0_i32_0 = arith.constant 0 : i32
    return %arg0, %c0_i32 : i32, i32
  }
  func.func @transform_11(%arg0: i32) -> (i32, i32) {
    %c0_i32 = arith.constant 0 : i32
    %c0_i32_0 = arith.constant 0 : i32
    return %arg0, %c0_i32 : i32, i32
  }
}

</mosaic_0001>

<llo_original>
// kernel: hand_hmr_forward.1
$region0: #{hand_hmr_forward.1}
  #allocation0 [shape = 'u32[]', space=smem, size = 0x4, offset = 0x4, fixed_abs, tag = 'smem constant byte address 0x4 - core index']
  #allocation1 [shape = 'u32[144,128]{1,0:T(1,128)}', space=vmem, size = 0x12000, scoped, tag = 'internal scratch']
  %s0 = inlined_call_operand.vmem [shape: f32[8,32], index: 0, kind: input, shape index: {}]
  %s1 = inlined_call_operand.hbm [shape: f32[32,256], index: 1, kind: input, shape index: {}]
  %s2 = inlined_call_operand.hbm [shape: f32[1,256], index: 2, kind: input, shape index: {}]
  %s3 = inlined_call_operand.hbm [shape: f32[128,128], index: 3, kind: input, shape index: {}]
  %s4 = inlined_call_operand.hbm [shape: f32[128,128], index: 4, kind: input, shape index: {}]
  %s5 = inlined_call_operand.hbm [shape: f32[1,128], index: 5, kind: input, shape index: {}]
  %s6 = inlined_call_operand.hbm [shape: f32[128,128], index: 6, kind: input, shape index: {}]
  %s7 = inlined_call_operand.hbm [shape: f32[1,128], index: 7, kind: input, shape index: {}]
  %s8 = inlined_call_operand.hbm [shape: f32[128,768], index: 8, kind: input, shape index: {}]
  %s9 = inlined_call_operand.hbm [shape: f32[1152,256], index: 9, kind: input, shape index: {}]
  %s10 = inlined_call_operand.vmem [shape: f32[8,128], index: 10, kind: output, shape index: {0}]
  %s11 = inlined_call_operand.vmem [shape: f32[8,256], index: 11, kind: output, shape index: {1}]
  %12 = xla_tuple %s10, %s11
  %s13 = sld [smem:[#allocation0]]
  $region94: #{hand_hmr_forward.1} parent=0
    _
  %s15 = ssub.s32 1, %s13
  %s16 = scalar_select 0, %s15, %s13
  $region1: #{hand_hmr_forward.1} parent=0
    #allocation2 [shape = 'u8[32768]{0}', space=vmem, size = 0x8000, scoped, tag = 'input window, operand 1, single buffered']
    #allocation3 [shape = 's32[1]{0}', space=sflag, size = 0x4, scoped, tag = 'scoped memory for hand_hmr_forward.1']
    #allocation4 [shape = 'u8[1024]{0}', space=vmem, size = 0x400, scoped, tag = 'input window, operand 2, single buffered']
    #allocation5 [shape = 's32[1]{0}', space=sflag, size = 0x4, scoped, tag = 'scoped memory for hand_hmr_forward.1']
    #allocation6 [shape = 'u8[65536]{0}', space=vmem, size = 0x10000, scoped, tag = 'input window, operand 3, single buffered']
    #allocation7 [shape = 'u8[65536]{0}', space=vmem, size = 0x10000, scoped, tag = 'input window, operand 4, single buffered']
    #allocation8 [shape = 's32[1]{0}', space=sflag, size = 0x4, scoped, tag = 'scoped memory for hand_hmr_forward.1']
    #allocation9 [shape = 'u8[512]{0}', space=vmem, size = 0x400, scoped, tag = 'input window, operand 5, single buffered']
    #allocation10 [shape = 'u8[65536]{0}', space=vmem, size = 0x10000, scoped, tag = 'input window, operand 6, single buffered']
    #allocation11 [shape = 's32[1]{0}', space=sflag, size = 0x4, scoped, tag = 'scoped memory for hand_hmr_forward.1']
    #allocation12 [shape = 'u8[512]{0}', space=vmem, size = 0x400, scoped, tag = 'input window, operand 7, single buffered']
    #allocation13 [shape = 'u8[393216]{0}', space=vmem, size = 0x60000, scoped, tag = 'input window, operand 8, single buffered']
    #allocation14 [shape = 's32[1]{0}', space=sflag, size = 0x4, scoped, tag = 'scoped memory for hand_hmr_forward.1']
    #allocation15 [shape = 'u8[1179648]{0}', space=vmem, size = 0x120000, scoped, tag = 'input window, operand 9, single buffered']
    %17 = vsyncpa [#allocation3], 0
    %18 = vsyncpa [#allocation5], 0
    %19 = vsyncpa [#allocation8], 0
    %20 = vsyncpa [#allocation11], 0
    %21 = vsyncpa [#allocation14], 0
    // Predicated region
    $region2: #{hand_hmr_forward.1} parent=1 // pred_check
      _
    $region3: #{hand_hmr_forward.1} parent=1 // pred_check_branch
      %23 = sbr.rel (0) target = $region5
    $region4: #{hand_hmr_forward.1} parent=1 // pred_region
      _
    $region5: #{hand_hmr_forward.1} parent=1 // pred_fallthru
      _
    // Predicated region
    $region6: #{hand_hmr_forward.1} parent=1 // pred_check
      _
    $region7: #{hand_hmr_forward.1} parent=1 // pred_check_branch
      %25 = sbr.rel (0) target = $region9
    $region8: #{hand_hmr_forward.1} parent=1 // pred_region
      %s27 = ssub.s32 1024, 1024
      %28 = vsyncadd [#allocation3], %s27
      %s29 = sshll.u32 [#allocation2], 4
      %s30 = int_to_ptr.vmem [resolvable:$true] %s29
      %35 = dma.hbm_to_vmem [thread:$0]  %s1, 1024, %s30, [#allocation3], 256, 256, 16
    $region9: #{hand_hmr_forward.1} parent=1 // pred_fallthru
      _
    // Predicated region
    $region10: #{hand_hmr_forward.1} parent=1 // pred_check
      _
    $region11: #{hand_hmr_forward.1} parent=1 // pred_check_branch
      %37 = sbr.rel (0) target = $region13
    $region12: #{hand_hmr_forward.1} parent=1 // pred_region
      %s39 = ssub.s32 32, 32
      %40 = vsyncadd [#allocation5], %s39
      %s42 = sshll.u32 [#allocation4], 4
      %s43 = int_to_ptr.vmem [resolvable:$true] %s42
      %45 = dma.hbm_to_vmem [thread:$0]  %s2, 32, %s43, [#allocation5]
    $region13: #{hand_hmr_forward.1} parent=1 // pred_fallthru
      _
    // Predicated region
    $region14: #{hand_hmr_forward.1} parent=1 // pred_check
      _
    $region15: #{hand_hmr_forward.1} parent=1 // pred_check_branch
      %47 = sbr.rel (0) target = $region17
    $region16: #{hand_hmr_forward.1} parent=1 // pred_region
      %s49 = ssub.s32 2048, 2048
      %50 = vsyncadd [#allocation5], %s49
      %s51 = sshll.u32 [#allocation6], 4
      %s52 = int_to_ptr.vmem [resolvable:$true] %s51
      %57 = dma.hbm_to_vmem [thread:$0]  %s3, 2048, %s52, [#allocation5], 128, 128, 8
    $region17: #{hand_hmr_forward.1} parent=1 // pred_fallthru
      _
    // Predicated region
    $region18: #{hand_hmr_forward.1} parent=1 // pred_check
      _
    $region19: #{hand_hmr_forward.1} parent=1 // pred_check_branch
      %59 = sbr.rel (0) target = $region21
    $region20: #{hand_hmr_forward.1} parent=1 // pred_region
      %s61 = ssub.s32 2048, 2048
      %62 = vsyncadd [#allocation8], %s61
      %s63 = sshll.u32 [#allocation7], 4
      %s64 = int_to_ptr.vmem [resolvable:$true] %s63
      %69 = dma.hbm_to_vmem [thread:$0]  %s4, 2048, %s64, [#allocation8], 128, 128, 8
    $region21: #{hand_hmr_forward.1} parent=1 // pred_fallthru
      _
    // Predicated region
    $region22: #{hand_hmr_forward.1} parent=1 // pred_check
      _
    $region23: #{hand_hmr_forward.1} parent=1 // pred_check_branch
      %71 = sbr.rel (0) target = $region25
    $region24: #{hand_hmr_forward.1} parent=1 // pred_region
      %s73 = ssub.s32 16, 16
      %74 = vsyncadd [#allocation8], %s73
      %s76 = sshll.u32 [#allocation9], 4
      %s77 = int_to_ptr.vmem [resolvable:$true] %s76
      %79 = dma.hbm_to_vmem [thread:$0]  %s5, 16, %s77, [#allocation8]
    $region25: #{hand_hmr_forward.1} parent=1 // pred_fallthru
      _
    // Predicated region
    $region26: #{hand_hmr_forward.1} parent=1 // pred_check
      _
    $region27: #{hand_hmr_forward.1} parent=1 // pred_check_branch
      %81 = sbr.rel (0) target = $region29
    $region28: #{hand_hmr_forward.1} parent=1 // pred_region
      %s83 = ssub.s32 2048, 2048
      %84 = vsyncadd [#allocation11], %s83
      %s85 = sshll.u32 [#allocation10], 4
      %s86 = int_to_ptr.vmem [resolvable:$true] %s85
      %91 = dma.hbm_to_vmem [thread:$0]  %s6, 2048, %s86, [#allocation11], 128, 128, 8
    $region29: #{hand_hmr_forward.1} parent=1 // pred_fallthru
      _
    // Predicated region
    $region30: #{hand_hmr_forward.1} parent=1 // pred_check
      _
    $region31: #{hand_hmr_forward.1} parent=1 // pred_check_branch
      %93 = sbr.rel (0) target = $region33
    $region32: #{hand_hmr_forward.1} parent=1 // pred_region
      %s95 = ssub.s32 16, 16
      %96 = vsyncadd [#allocation11], %s95
      %s98 = sshll.u32 [#allocation12], 4
      %s99 = int_to_ptr.vmem [resolvable:$true] %s98
      %101 = dma.hbm_to_vmem [thread:$0]  %s7, 16, %s99, [#allocation11]
    $region33: #{hand_hmr_forward.1} parent=1 // pred_fallthru
      _
    // Predicated region
    $region34: #{hand_hmr_forward.1} parent=1 // pred_check
      _
    $region35: #{hand_hmr_forward.1} parent=1 // pred_check_branch
      %103 = sbr.rel (0) target = $region37
    $region36: #{hand_hmr_forward.1} parent=1 // pred_region
      %s105 = ssub.s32 12288, 12288
      %106 = vsyncadd [#allocation14], %s105
      %s107 = sshll.u32 [#allocation13], 4
      %s108 = int_to_ptr.vmem [resolvable:$true] %s107
      %113 = dma.hbm_to_vmem [thread:$0]  %s8, 12288, %s108, [#allocation14], 768, 768, 48
    $region37: #{hand_hmr_forward.1} parent=1 // pred_fallthru
      _
    // Predicated region
    $region38: #{hand_hmr_forward.1} parent=1 // pred_check
      _
    $region39: #{hand_hmr_forward.1} parent=1 // pred_check_branch
      %115 = sbr.rel (0) target = $region41
    $region40: #{hand_hmr_forward.1} parent=1 // pred_region
      %s117 = ssub.s32 36864, 36864
      %118 = vsyncadd [#allocation14], %s117
      %s119 = sshll.u32 [#allocation15], 4
      %s120 = int_to_ptr.vmem [resolvable:$true] %s119
      %125 = dma.hbm_to_vmem [thread:$0]  %s9, 36864, %s120, [#allocation14], 256, 256, 16
    $region41: #{hand_hmr_forward.1} parent=1 // pred_fallthru
      _
    // Predicated region
    $region42: #{hand_hmr_forward.1} parent=1 // pred_check
      _
    $region43: #{hand_hmr_forward.1} parent=1 // pred_check_branch
      %127 = sbr.rel (0) target = $region45
    $region44: #{hand_hmr_forward.1} parent=1 // pred_region
      %128 = dma.done [#allocation3], 1024
    $region45: #{hand_hmr_forward.1} parent=1 // pred_fallthru
      _
    // Predicated region
    $region46: #{hand_hmr_forward.1} parent=1 // pred_check
      _
    $region47: #{hand_hmr_forward.1} parent=1 // pred_check_branch
      %130 = sbr.rel (0) target = $region49
    $region48: #{hand_hmr_forward.1} parent=1 // pred_region
      %131 = dma.done [#allocation5], 32
    $region49: #{hand_hmr_forward.1} parent=1 // pred_fallthru
      _
    // Predicated region
    $region50: #{hand_hmr_forward.1} parent=1 // pred_check
      _
    $region51: #{hand_hmr_forward.1} parent=1 // pred_check_branch
      %133 = sbr.rel (0) target = $region53
    $region52: #{hand_hmr_forward.1} parent=1 // pred_region
      %134 = dma.done [#allocation5], 2048
    $region53: #{hand_hmr_forward.1} parent=1 // pred_fallthru
      _
    // Predicated region
    $region54: #{hand_hmr_forward.1} parent=1 // pred_check
      _
    $region55: #{hand_hmr_forward.1} parent=1 // pred_check_branch
      %136 = sbr.rel (0) target = $region57
    $region56: #{hand_hmr_forward.1} parent=1 // pred_region
      %137 = dma.done [#allocation8], 2048
    $region57: #{hand_hmr_forward.1} parent=1 // pred_fallthru
      _
    // Predicated region
    $region58: #{hand_hmr_forward.1} parent=1 // pred_check
      _
    $region59: #{hand_hmr_forward.1} parent=1 // pred_check_branch
      %139 = sbr.rel (0) target = $region61
    $region60: #{hand_hmr_forward.1} parent=1 // pred_region
      %140 = dma.done [#allocation8], 16
    $region61: #{hand_hmr_forward.1} parent=1 // pred_fallthru
      _
    // Predicated region
    $region62: #{hand_hmr_forward.1} parent=1 // pred_check
      _
    $region63: #{hand_hmr_forward.1} parent=1 // pred_check_branch
      %142 = sbr.rel (0) target = $region65
    $region64: #{hand_hmr_forward.1} parent=1 // pred_region
      %143 = dma.done [#allocation11], 2048
    $region65: #{hand_hmr_forward.1} parent=1 // pred_fallthru
      _
    // Predicated region
    $region66: #{hand_hmr_forward.1} parent=1 // pred_check
      _
    $region67: #{hand_hmr_forward.1} parent=1 // pred_check_branch
      %145 = sbr.rel (0) target = $region69
    $region68: #{hand_hmr_forward.1} parent=1 // pred_region
      %146 = dma.done [#allocation11], 16
    $region69: #{hand_hmr_forward.1} parent=1 // pred_fallthru
      _
    // Predicated region
    $region70: #{hand_hmr_forward.1} parent=1 // pred_check
      _
    $region71: #{hand_hmr_forward.1} parent=1 // pred_check_branch
      %148 = sbr.rel (0) target = $region73
    $region72: #{hand_hmr_forward.1} parent=1 // pred_region
      %149 = dma.done [#allocation14], 12288
    $region73: #{hand_hmr_forward.1} parent=1 // pred_fallthru
      _
    // Predicated region
    $region74: #{hand_hmr_forward.1} parent=1 // pred_check
      _
    $region75: #{hand_hmr_forward.1} parent=1 // pred_check_branch
      %151 = sbr.rel (0) target = $region77
    $region76: #{hand_hmr_forward.1} parent=1 // pred_region
      %152 = dma.done [#allocation14], 36864
    $region77: #{hand_hmr_forward.1} parent=1 // pred_fallthru
      _
    %v153 = vld [vmem:[%s0] sm:$0xff]
    %v154 = vld [vmem:[#allocation2] sm:$0xff]
    %v155 = vld [vmem:[#allocation2 + $0x8] sm:$0xff]
    %v156 = vld [vmem:[#allocation2 + $0x10] sm:$0xff]
    %v157 = vld [vmem:[#allocation2 + $0x18] sm:$0xff]
    %v158 = vld [vmem:[#allocation2 + $0x20] sm:$0xff]
    %v159 = vld [vmem:[#allocation2 + $0x28] sm:$0xff]
    %v160 = vld [vmem:[#allocation2 + $0x30] sm:$0xff]
    %v161 = vld [vmem:[#allocation2 + $0x38] sm:$0xff]
    %v162 = vld [vmem:[#allocation4] sm:$0x3]
    %v164 = vlaneseq
    %v165 = vshrl.u32 %v164, 7
    %v166 = vsub.s32 0, %v165
    %v167 = vrot.slane %v162, %v166
    %v168 = vlaneseq
    %v169 = vshrl.u32 %v168, 7
    %v170 = vsub.s32 1, %v169
    %v171 = vrot.slane %v162, %v170
    %vm174 = vcmask 261120
    %v176 = vsel %vm174, %v153, 0
    %178 = vmatprep.subr.mxu0 %v155
    %179 = vmatpush1.msra.mxu0 %v154
    %180 = vmatprep.subr.mxu0 %v157
    %181 = vmatpush1.msra.mxu0 %v156
    %182 = vmatprep.subr.mxu0 %v159
    %183 = vmatpush1.msra.mxu0 %v158
    %184 = vmatprep.subr.mxu0 %v161
    %185 = vmatpush1.msra.mxu0 %v160
    %186 = vmatprep.subr.mxu0 0.0
    %187 = vmatpush1.msra.mxu0 0.0
    %188 = vmatprep.subr.mxu0 0.0
    %189 = vmatpush1.msra.mxu0 0.0
    %190 = vmatprep.subr.mxu0 0.0
    %191 = vmatpush1.msra.mxu0 0.0
    %192 = vmatprep.subr.mxu0 0.0
    %193 = vmatpush1.msra.mxu0 0.0
    %194 = vmatprep.subr.mxu0 0.0
    %195 = vmatpush1.msra.mxu0 0.0
    %196 = vmatprep.subr.mxu0 0.0
    %197 = vmatpush1.msra.mxu0 0.0
    %198 = vmatprep.subr.mxu0 0.0
    %199 = vmatpush1.msra.mxu0 0.0
    %200 = vmatprep.subr.mxu0 0.0
    %201 = vmatpush1.msra.mxu0 0.0
    %202 = vmatprep.subr.mxu0 0.0
    %203 = vmatpush1.msra.mxu0 0.0
    %204 = vmatprep.subr.mxu0 0.0
    %205 = vmatpush1.msra.mxu0 0.0
    %206 = vmatprep.subr.mxu0 0.0
    %207 = vmatpush1.msra.mxu0 0.0
    %208 = vmatprep.subr.mxu0 0.0
    %209 = vmatpush1.msra.mxu0 0.0
    %210 = vmatprep.subr.mxu0 0.0
    %211 = vmatpush1.msra.mxu0 0.0
    %212 = vmatprep.subr.mxu0 0.0
    %213 = vmatpush1.msra.mxu0 0.0
    %214 = vmatprep.subr.mxu0 0.0
    %215 = vmatpush1.msra.mxu0 0.0
    %216 = vmatprep.subr.mxu0 0.0
    %217 = vmatpush1.msra.mxu0 0.0
    %218 = vmatprep.subr.mxu0 0.0
    %219 = vmatpush1.msra.mxu0 0.0
    %220 = vmatprep.subr.mxu0 0.0
    %221 = vmatpush1.msra.mxu0 0.0
    %222 = vmatprep.subr.mxu0 0.0
    %223 = vmatpush1.msra.mxu0 0.0
    %224 = vmatprep.subr.mxu0 0.0
    %225 = vmatpush1.msra.mxu0 0.0
    %226 = vmatprep.subr.mxu0 0.0
    %227 = vmatpush1.msra.mxu0 0.0
    %228 = vmatprep.subr.mxu0 0.0
    %229 = vmatpush1.msra.mxu0 0.0
    %230 = vmatprep.subr.mxu0 0.0
    %231 = vmatpush1.msra.mxu0 0.0
    %232 = vmatprep.subr.mxu0 0.0
    %233 = vmatpush1.msra.mxu0 0.0
    %234 = vmatprep.subr.mxu0 0.0
    %235 = vmatpush1.msra.mxu0 0.0
    %236 = vmatprep.subr.mxu0 0.0
    %237 = vmatpush1.msra.mxu0 0.0
    %238 = vmatprep.subr.mxu0 0.0
    %239 = vmatpush1.msra.mxu0 0.0
    %240 = vmatprep.subr.mxu0 0.0
    %241 = vmatpush1.msra.mxu0 0.0
    %242 = vmatprep.mubr.f32.mxu0 0.0
    %243 = vmatmul.mubr.f32.gmra.mrb[0].mxu0 %v176
    %v244 = vpop.f32.mrb[0].mxu0
    %v245 = vadd.f32 %v167, %v244
    %v246 = vpop.f32.mrb[0].mxu0
    %v247 = vadd.f32 %v171, %v246
    %248 = vdwg.mxu0
    %v249 = vld [vmem:[#allocation6] sm:$0xff]
    %v250 = vld [vmem:[#allocation6 + $0x8] sm:$0xff]
    %v251 = vld [vmem:[#allocation6 + $0x10] sm:$0xff]
    %v252 = vld [vmem:[#allocation6 + $0x18] sm:$0xff]
    %v253 = vld [vmem:[#allocation6 + $0x20] sm:$0xff]
    %v254 = vld [vmem:[#allocation6 + $0x28] sm:$0xff]
    %v255 = vld [vmem:[#allocation6 + $0x30] sm:$0xff]
    %v256 = vld [vmem:[#allocation6 + $0x38] sm:$0xff]
    %v257 = vld [vmem:[#allocation6 + $0x40] sm:$0xff]
    %v258 = vld [vmem:[#allocation6 + $0x48] sm:$0xff]
    %v259 = vld [vmem:[#allocation6 + $0x50] sm:$0xff]
    %v260 = vld [vmem:[#allocation6 + $0x58] sm:$0xff]
    %v261 = vld [vmem:[#allocation6 + $0x60] sm:$0xff]
    %v262 = vld [vmem:[#allocation6 + $0x68] sm:$0xff]
    %v263 = vld [vmem:[#allocation6 + $0x70] sm:$0xff]
    %v264 = vld [vmem:[#allocation6 + $0x78] sm:$0xff]
    %v265 = vld [vmem:[#allocation7] sm:$0xff]
    %v266 = vld [vmem:[#allocation7 + $0x8] sm:$0xff]
    %v267 = vld [vmem:[#allocation7 + $0x10] sm:$0xff]
    %v268 = vld [vmem:[#allocation7 + $0x18] sm:$0xff]
    %v269 = vld [vmem:[#allocation7 + $0x20] sm:$0xff]
    %v270 = vld [vmem:[#allocation7 + $0x28] sm:$0xff]
    %v271 = vld [vmem:[#allocation7 + $0x30] sm:$0xff]
    %v272 = vld [vmem:[#allocation7 + $0x38] sm:$0xff]
    %v273 = vld [vmem:[#allocation7 + $0x40] sm:$0xff]
    %v274 = vld [vmem:[#allocation7 + $0x48] sm:$0xff]
    %v275 = vld [vmem:[#allocation7 + $0x50] sm:$0xff]
    %v276 = vld [vmem:[#allocation7 + $0x58] sm:$0xff]
    %v277 = vld [vmem:[#allocation7 + $0x60] sm:$0xff]
    %v278 = vld [vmem:[#allocation7 + $0x68] sm:$0xff]
    %v279 = vld [vmem:[#allocation7 + $0x70] sm:$0xff]
    %v280 = vld [vmem:[#allocation7 + $0x78] sm:$0xff]
    %v281 = vld [vmem:[#allocation9] sm:$0x1]
    %v282 = vld [vmem:[#allocation10] sm:$0xff]
    %v283 = vld [vmem:[#allocation10 + $0x8] sm:$0xff]
    %v284 = vld [vmem:[#allocation10 + $0x10] sm:$0xff]
    %v285 = vld [vmem:[#allocation10 + $0x18] sm:$0xff]
    %v286 = vld [vmem:[#allocation10 + $0x20] sm:$0xff]
    %v287 = vld [vmem:[#allocation10 + $0x28] sm:$0xff]
    %v288 = vld [vmem:[#allocation10 + $0x30] sm:$0xff]
    %v289 = vld [vmem:[#allocation10 + $0x38] sm:$0xff]
    %v290 = vld [vmem:[#allocation10 + $0x40] sm:$0xff]
    %v291 = vld [vmem:[#allocation10 + $0x48] sm:$0xff]
    %v292 = vld [vmem:[#allocation10 + $0x50] sm:$0xff]
    %v293 = vld [vmem:[#allocation10 + $0x58] sm:$0xff]
    %v294 = vld [vmem:[#allocation10 + $0x60] sm:$0xff]
    %v295 = vld [vmem:[#allocation10 + $0x68] sm:$0xff]
    %v296 = vld [vmem:[#allocation10 + $0x70] sm:$0xff]
    %v297 = vld [vmem:[#allocation10 + $0x78] sm:$0xff]
    %v298 = vld [vmem:[#allocation12] sm:$0x1]
    %299 = vmatprep.subr.mxu0 0.0
    %300 = vmatpush1.msra.mxu0 %v249
    %301 = vmatprep.subr.mxu0 0.0
    %302 = vmatpush1.msra.mxu0 %v250
    %303 = vmatprep.subr.mxu0 0.0
    %304 = vmatpush1.msra.mxu0 %v251
    %305 = vmatprep.subr.mxu0 0.0
    %306 = vmatpush1.msra.mxu0 %v252
    %307 = vmatprep.subr.mxu0 0.0
    %308 = vmatpush1.msra.mxu0 %v253
    %309 = vmatprep.subr.mxu0 0.0
    %310 = vmatpush1.msra.mxu0 %v254
    %311 = vmatprep.subr.mxu0 0.0
    %312 = vmatpush1.msra.mxu0 %v255
    %313 = vmatprep.subr.mxu0 0.0
    %314 = vmatpush1.msra.mxu0 %v256
    %315 = vmatprep.subr.mxu0 0.0
    %316 = vmatpush1.msra.mxu0 %v257
    %317 = vmatprep.subr.mxu0 0.0
    %318 = vmatpush1.msra.mxu0 %v258
    %319 = vmatprep.subr.mxu0 0.0
    %320 = vmatpush1.msra.mxu0 %v259
    %321 = vmatprep.subr.mxu0 0.0
    %322 = vmatpush1.msra.mxu0 %v260
    %323 = vmatprep.subr.mxu0 0.0
    %324 = vmatpush1.msra.mxu0 %v261
    %325 = vmatprep.subr.mxu0 0.0
    %326 = vmatpush1.msra.mxu0 %v262
    %327 = vmatprep.subr.mxu0 0.0
    %328 = vmatpush1.msra.mxu0 %v263
    %329 = vmatprep.subr.mxu0 0.0
    %330 = vmatpush1.msra.mxu0 %v264
    %331 = vmatprep.subr.mxu0 0.0
    %332 = vmatpush1.msra.mxu0 0.0
    %333 = vmatprep.subr.mxu0 0.0
    %334 = vmatpush1.msra.mxu0 0.0
    %335 = vmatprep.subr.mxu0 0.0
    %336 = vmatpush1.msra.mxu0 0.0
    %337 = vmatprep.subr.mxu0 0.0
    %338 = vmatpush1.msra.mxu0 0.0
    %339 = vmatprep.subr.mxu0 0.0
    %340 = vmatpush1.msra.mxu0 0.0
    %341 = vmatprep.subr.mxu0 0.0
    %342 = vmatpush1.msra.mxu0 0.0
    %343 = vmatprep.subr.mxu0 0.0
    %344 = vmatpush1.msra.mxu0 0.0
    %345 = vmatprep.subr.mxu0 0.0
    %346 = vmatpush1.msra.mxu0 0.0
    %347 = vmatprep.subr.mxu0 0.0
    %348 = vmatpush1.msra.mxu0 0.0
    %349 = vmatprep.subr.mxu0 0.0
    %350 = vmatpush1.msra.mxu0 0.0
    %351 = vmatprep.subr.mxu0 0.0
    %352 = vmatpush1.msra.mxu0 0.0
    %353 = vmatprep.subr.mxu0 0.0
    %354 = vmatpush1.msra.mxu0 0.0
    %355 = vmatprep.subr.mxu0 0.0
    %356 = vmatpush1.msra.mxu0 0.0
    %357 = vmatprep.subr.mxu0 0.0
    %358 = vmatpush1.msra.mxu0 0.0
    %359 = vmatprep.subr.mxu0 0.0
    %360 = vmatpush1.msra.mxu0 0.0
    %361 = vmatprep.subr.mxu0 0.0
    %362 = vmatpush1.msra.mxu0 0.0
    %363 = vmatprep.mubr.f32.mxu0 0.0
    %364 = vmatmul.mubr.f32.gmra.mrb[0].mxu0 %v247
    %v365 = vpop.f32.mrb[0].mxu0
    %v366 = vadd.f32 0.0, %v365
    %v367 = vpop.f32.mrb[0].mxu0
    %368 = vdwg.mxu0
    %v369 = vadd.f32 %v245, %v366
    %v370 = vmax.f32 %v369, 0.0
    %v372 = vlaneseq
    %v373 = vshrl.u32 %v372, 7
    %v374 = vsub.s32 0, %v373
    %v375 = vrot.slane %v281, %v374
    %377 = vmatprep.subr.mxu0 0.0
    %378 = vmatpush1.msra.mxu0 %v265
    %379 = vmatprep.subr.mxu0 0.0
    %380 = vmatpush1.msra.mxu0 %v266
    %381 = vmatprep.subr.mxu0 0.0
    %382 = vmatpush1.msra.mxu0 %v267
    %383 = vmatprep.subr.mxu0 0.0
    %384 = vmatpush1.msra.mxu0 %v268
    %385 = vmatprep.subr.mxu0 0.0
    %386 = vmatpush1.msra.mxu0 %v269
    %387 = vmatprep.subr.mxu0 0.0
    %388 = vmatpush1.msra.mxu0 %v270
    %389 = vmatprep.subr.mxu0 0.0
    %390 = vmatpush1.msra.mxu0 %v271
    %391 = vmatprep.subr.mxu0 0.0
    %392 = vmatpush1.msra.mxu0 %v272
    %393 = vmatprep.subr.mxu0 0.0
    %394 = vmatpush1.msra.mxu0 %v273
    %395 = vmatprep.subr.mxu0 0.0
    %396 = vmatpush1.msra.mxu0 %v274
    %397 = vmatprep.subr.mxu0 0.0
    %398 = vmatpush1.msra.mxu0 %v275
    %399 = vmatprep.subr.mxu0 0.0
    %400 = vmatpush1.msra.mxu0 %v276
    %401 = vmatprep.subr.mxu0 0.0
    %402 = vmatpush1.msra.mxu0 %v277
    %403 = vmatprep.subr.mxu0 0.0
    %404 = vmatpush1.msra.mxu0 %v278
    %405 = vmatprep.subr.mxu0 0.0
    %406 = vmatpush1.msra.mxu0 %v279
    %407 = vmatprep.subr.mxu0 0.0
    %408 = vmatpush1.msra.mxu0 %v280
    %409 = vmatprep.subr.mxu0 0.0
    %410 = vmatpush1.msra.mxu0 0.0
    %411 = vmatprep.subr.mxu0 0.0
    %412 = vmatpush1.msra.mxu0 0.0
    %413 = vmatprep.subr.mxu0 0.0
    %414 = vmatpush1.msra.mxu0 0.0
    %415 = vmatprep.subr.mxu0 0.0
    %416 = vmatpush1.msra.mxu0 0.0
    %417 = vmatprep.subr.mxu0 0.0
    %418 = vmatpush1.msra.mxu0 0.0
    %419 = vmatprep.subr.mxu0 0.0
    %420 = vmatpush1.msra.mxu0 0.0
    %421 = vmatprep.subr.mxu0 0.0
    %422 = vmatpush1.msra.mxu0 0.0
    %423 = vmatprep.subr.mxu0 0.0
    %424 = vmatpush1.msra.mxu0 0.0
    %425 = vmatprep.subr.mxu0 0.0
    %426 = vmatpush1.msra.mxu0 0.0
    %427 = vmatprep.subr.mxu0 0.0
    %428 = vmatpush1.msra.mxu0 0.0
    %429 = vmatprep.subr.mxu0 0.0
    %430 = vmatpush1.msra.mxu0 0.0
    %431 = vmatprep.subr.mxu0 0.0
    %432 = vmatpush1.msra.mxu0 0.0
    %433 = vmatprep.subr.mxu0 0.0
    %434 = vmatpush1.msra.mxu0 0.0
    %435 = vmatprep.subr.mxu0 0.0
    %436 = vmatpush1.msra.mxu0 0.0
    %437 = vmatprep.subr.mxu0 0.0
    %438 = vmatpush1.msra.mxu0 0.0
    %439 = vmatprep.subr.mxu0 0.0
    %440 = vmatpush1.msra.mxu0 0.0
    %441 = vmatprep.mubr.f32.mxu0 0.0
    %442 = vmatmul.mubr.f32.gmra.mrb[0].mxu0 %v370
    %v443 = vpop.f32.mrb[0].mxu0
    %v444 = vadd.f32 %v375, %v443
    %v445 = vpop.f32.mrb[0].mxu0
    %446 = vdwg.mxu0
    %v447 = vmax.f32 %v444, 0.0
    %448 = vmatprep.subr.mxu0 0.0
    %449 = vmatpush1.msra.mxu0 %v282
    %450 = vmatprep.subr.mxu0 0.0
    %451 = vmatpush1.msra.mxu0 %v283
    %452 = vmatprep.subr.mxu0 0.0
    %453 = vmatpush1.msra.mxu0 %v284
    %454 = vmatprep.subr.mxu0 0.0
    %455 = vmatpush1.msra.mxu0 %v285
    %456 = vmatprep.subr.mxu0 0.0
    %457 = vmatpush1.msra.mxu0 %v286
    %458 = vmatprep.subr.mxu0 0.0
    %459 = vmatpush1.msra.mxu0 %v287
    %460 = vmatprep.subr.mxu0 0.0
    %461 = vmatpush1.msra.mxu0 %v288
    %462 = vmatprep.subr.mxu0 0.0
    %463 = vmatpush1.msra.mxu0 %v289
    %464 = vmatprep.subr.mxu0 0.0
    %465 = vmatpush1.msra.mxu0 %v290
    %466 = vmatprep.subr.mxu0 0.0
    %467 = vmatpush1.msra.mxu0 %v291
    %468 = vmatprep.subr.mxu0 0.0
    %469 = vmatpush1.msra.mxu0 %v292
    %470 = vmatprep.subr.mxu0 0.0
    %471 = vmatpush1.msra.mxu0 %v293
    %472 = vmatprep.subr.mxu0 0.0
    %473 = vmatpush1.msra.mxu0 %v294
    %474 = vmatprep.subr.mxu0 0.0
    %475 = vmatpush1.msra.mxu0 %v295
    %476 = vmatprep.subr.mxu0 0.0
    %477 = vmatpush1.msra.mxu0 %v296
    %478 = vmatprep.subr.mxu0 0.0
    %479 = vmatpush1.msra.mxu0 %v297
    %480 = vmatprep.subr.mxu0 0.0
    %481 = vmatpush1.msra.mxu0 0.0
    %482 = vmatprep.subr.mxu0 0.0
    %483 = vmatpush1.msra.mxu0 0.0
    %484 = vmatprep.subr.mxu0 0.0
    %485 = vmatpush1.msra.mxu0 0.0
    %486 = vmatprep.subr.mxu0 0.0
    %487 = vmatpush1.msra.mxu0 0.0
    %488 = vmatprep.subr.mxu0 0.0
    %489 = vmatpush1.msra.mxu0 0.0
    %490 = vmatprep.subr.mxu0 0.0
    %491 = vmatpush1.msra.mxu0 0.0
    %492 = vmatprep.subr.mxu0 0.0
    %493 = vmatpush1.msra.mxu0 0.0
    %494 = vmatprep.subr.mxu0 0.0
    %495 = vmatpush1.msra.mxu0 0.0
    %496 = vmatprep.subr.mxu0 0.0
    %497 = vmatpush1.msra.mxu0 0.0
    %498 = vmatprep.subr.mxu0 0.0
    %499 = vmatpush1.msra.mxu0 0.0
    %500 = vmatprep.subr.mxu0 0.0
    %501 = vmatpush1.msra.mxu0 0.0
    %502 = vmatprep.subr.mxu0 0.0
    %503 = vmatpush1.msra.mxu0 0.0
    %504 = vmatprep.subr.mxu0 0.0
    %505 = vmatpush1.msra.mxu0 0.0
    %506 = vmatprep.subr.mxu0 0.0
    %507 = vmatpush1.msra.mxu0 0.0
    %508 = vmatprep.subr.mxu0 0.0
    %509 = vmatpush1.msra.mxu0 0.0
    %510 = vmatprep.subr.mxu0 0.0
    %511 = vmatpush1.msra.mxu0 0.0
    %512 = vmatprep.mubr.f32.mxu0 0.0
    %513 = vmatmul.mubr.f32.gmra.mrb[0].mxu0 %v447
    %v514 = vpop.f32.mrb[0].mxu0
    %v515 = vadd.f32 0.0, %v514
    %v516 = vpop.f32.mrb[0].mxu0
    %517 = vdwg.mxu0
    %v518 = vadd.f32 %v247, %v515
    %v520 = vlaneseq
    %v521 = vshrl.u32 %v520, 7
    %v522 = vsub.s32 0, %v521
    %v523 = vrot.slane %v298, %v522
    %v525 = vadd.f32 %v518, %v523
    %526 = vmatprep.subr.mxu0 0.0
    %527 = vmatpush1.msra.mxu0 %v249
    %528 = vmatprep.subr.mxu0 0.0
    %529 = vmatpush1.msra.mxu0 %v250
    %530 = vmatprep.subr.mxu0 0.0
    %531 = vmatpush1.msra.mxu0 %v251
    %532 = vmatprep.subr.mxu0 0.0
    %533 = vmatpush1.msra.mxu0 %v252
    %534 = vmatprep.subr.mxu0 0.0
    %535 = vmatpush1.msra.mxu0 %v253
    %536 = vmatprep.subr.mxu0 0.0
    %537 = vmatpush1.msra.mxu0 %v254
    %538 = vmatprep.subr.mxu0 0.0
    %539 = vmatpush1.msra.mxu0 %v255
    %540 = vmatprep.subr.mxu0 0.0
    %541 = vmatpush1.msra.mxu0 %v256
    %542 = vmatprep.subr.mxu0 0.0
    %543 = vmatpush1.msra.mxu0 %v257
    %544 = vmatprep.subr.mxu0 0.0
    %545 = vmatpush1.msra.mxu0 %v258
    %546 = vmatprep.subr.mxu0 0.0
    %547 = vmatpush1.msra.mxu0 %v259
    %548 = vmatprep.subr.mxu0 0.0
    %549 = vmatpush1.msra.mxu0 %v260
    %550 = vmatprep.subr.mxu0 0.0
    %551 = vmatpush1.msra.mxu0 %v261
    %552 = vmatprep.subr.mxu0 0.0
    %553 = vmatpush1.msra.mxu0 %v262
    %554 = vmatprep.subr.mxu0 0.0
    %555 = vmatpush1.msra.mxu0 %v263
    %556 = vmatprep.subr.mxu0 0.0
    %557 = vmatpush1.msra.mxu0 %v264
    %558 = vmatprep.subr.mxu0 0.0
    %559 = vmatpush1.msra.mxu0 0.0
    %560 = vmatprep.subr.mxu0 0.0
    %561 = vmatpush1.msra.mxu0 0.0
    %562 = vmatprep.subr.mxu0 0.0
    %563 = vmatpush1.msra.mxu0 0.0
    %564 = vmatprep.subr.mxu0 0.0
    %565 = vmatpush1.msra.mxu0 0.0
    %566 = vmatprep.subr.mxu0 0.0
    %567 = vmatpush1.msra.mxu0 0.0
    %568 = vmatprep.subr.mxu0 0.0
    %569 = vmatpush1.msra.mxu0 0.0
    %570 = vmatprep.subr.mxu0 0.0
    %571 = vmatpush1.msra.mxu0 0.0
    %572 = vmatprep.subr.mxu0 0.0
    %573 = vmatpush1.msra.mxu0 0.0
    %574 = vmatprep.subr.mxu0 0.0
    %575 = vmatpush1.msra.mxu0 0.0
    %576 = vmatprep.subr.mxu0 0.0
    %577 = vmatpush1.msra.mxu0 0.0
    %578 = vmatprep.subr.mxu0 0.0
    %579 = vmatpush1.msra.mxu0 0.0
    %580 = vmatprep.subr.mxu0 0.0
    %581 = vmatpush1.msra.mxu0 0.0
    %582 = vmatprep.subr.mxu0 0.0
    %583 = vmatpush1.msra.mxu0 0.0
    %584 = vmatprep.subr.mxu0 0.0
    %585 = vmatpush1.msra.mxu0 0.0
    %586 = vmatprep.subr.mxu0 0.0
    %587 = vmatpush1.msra.mxu0 0.0
    %588 = vmatprep.subr.mxu0 0.0
    %589 = vmatpush1.msra.mxu0 0.0
    %590 = vmatprep.mubr.f32.mxu0 0.0
    %591 = vmatmul.mubr.f32.gmra.mrb[0].mxu0 %v525
    %v592 = vpop.f32.mrb[0].mxu0
    %v593 = vadd.f32 0.0, %v592
    %v594 = vpop.f32.mrb[0].mxu0
    %595 = vdwg.mxu0
    %v596 = vadd.f32 %v245, %v593
    %v597 = vmax.f32 %v596, 0.0
    %598 = vmatprep.subr.mxu0 0.0
    %599 = vmatpush1.msra.mxu0 %v265
    %600 = vmatprep.subr.mxu0 0.0
    %601 = vmatpush1.msra.mxu0 %v266
    %602 = vmatprep.subr.mxu0 0.0
    %603 = vmatpush1.msra.mxu0 %v267
    %604 = vmatprep.subr.mxu0 0.0
    %605 = vmatpush1.msra.mxu0 %v268
    %606 = vmatprep.subr.mxu0 0.0
    %607 = vmatpush1.msra.mxu0 %v269
    %608 = vmatprep.subr.mxu0 0.0
    %609 = vmatpush1.msra.mxu0 %v270
    %610 = vmatprep.subr.mxu0 0.0
    %611 = vmatpush1.msra.mxu0 %v271
    %612 = vmatprep.subr.mxu0 0.0
    %613 = vmatpush1.msra.mxu0 %v272
    %614 = vmatprep.subr.mxu0 0.0
    %615 = vmatpush1.msra.mxu0 %v273
    %616 = vmatprep.subr.mxu0 0.0
    %617 = vmatpush1.msra.mxu0 %v274
    %618 = vmatprep.subr.mxu0 0.0
    %619 = vmatpush1.msra.mxu0 %v275
    %620 = vmatprep.subr.mxu0 0.0
    %621 = vmatpush1.msra.mxu0 %v276
    %622 = vmatprep.subr.mxu0 0.0
    %623 = vmatpush1.msra.mxu0 %v277
    %624 = vmatprep.subr.mxu0 0.0
    %625 = vmatpush1.msra.mxu0 %v278
    %626 = vmatprep.subr.mxu0 0.0
    %627 = vmatpush1.msra.mxu0 %v279
    %628 = vmatprep.subr.mxu0 0.0
    %629 = vmatpush1.msra.mxu0 %v280
    %630 = vmatprep.subr.mxu0 0.0
    %631 = vmatpush1.msra.mxu0 0.0
    %632 = vmatprep.subr.mxu0 0.0
    %633 = vmatpush1.msra.mxu0 0.0
    %634 = vmatprep.subr.mxu0 0.0
    %635 = vmatpush1.msra.mxu0 0.0
    %636 = vmatprep.subr.mxu0 0.0
    %637 = vmatpush1.msra.mxu0 0.0
    %638 = vmatprep.subr.mxu0 0.0
    %639 = vmatpush1.msra.mxu0 0.0
    %640 = vmatprep.subr.mxu0 0.0
    %641 = vmatpush1.msra.mxu0 0.0
    %642 = vmatprep.subr.mxu0 0.0
    %643 = vmatpush1.msra.mxu0 0.0
    %644 = vmatprep.subr.mxu0 0.0
    %645 = vmatpush1.msra.mxu0 0.0
    %646 = vmatprep.subr.mxu0 0.0
    %647 = vmatpush1.msra.mxu0 0.0
    %648 = vmatprep.subr.mxu0 0.0
    %649 = vmatpush1.msra.mxu0 0.0
    %650 = vmatprep.subr.mxu0 0.0
    %651 = vmatpush1.msra.mxu0 0.0
    %652 = vmatprep.subr.mxu0 0.0
    %653 = vmatpush1.msra.mxu0 0.0
    %654 = vmatprep.subr.mxu0 0.0
    %655 = vmatpush1.msra.mxu0 0.0
    %656 = vmatprep.subr.mxu0 0.0
    %657 = vmatpush1.msra.mxu0 0.0
    %658 = vmatprep.subr.mxu0 0.0
    %659 = vmatpush1.msra.mxu0 0.0
    %660 = vmatprep.subr.mxu0 0.0
    %661 = vmatpush1.msra.mxu0 0.0
    %662 = vmatprep.mubr.f32.mxu0 0.0
    %663 = vmatmul.mubr.f32.gmra.mrb[0].mxu0 %v597
    %v664 = vpop.f32.mrb[0].mxu0
    %v665 = vadd.f32 %v375, %v664
    %v666 = vpop.f32.mrb[0].mxu0
    %667 = vdwg.mxu0
    %v668 = vmax.f32 %v665, 0.0
    %669 = vmatprep.subr.mxu0 0.0
    %670 = vmatpush1.msra.mxu0 %v282
    %671 = vmatprep.subr.mxu0 0.0
    %672 = vmatpush1.msra.mxu0 %v283
    %673 = vmatprep.subr.mxu0 0.0
    %674 = vmatpush1.msra.mxu0 %v284
    %675 = vmatprep.subr.mxu0 0.0
    %676 = vmatpush1.msra.mxu0 %v285
    %677 = vmatprep.subr.mxu0 0.0
    %678 = vmatpush1.msra.mxu0 %v286
    %679 = vmatprep.subr.mxu0 0.0
    %680 = vmatpush1.msra.mxu0 %v287
    %681 = vmatprep.subr.mxu0 0.0
    %682 = vmatpush1.msra.mxu0 %v288
    %683 = vmatprep.subr.mxu0 0.0
    %684 = vmatpush1.msra.mxu0 %v289
    %685 = vmatprep.subr.mxu0 0.0
    %686 = vmatpush1.msra.mxu0 %v290
    %687 = vmatprep.subr.mxu0 0.0
    %688 = vmatpush1.msra.mxu0 %v291
    %689 = vmatprep.subr.mxu0 0.0
    %690 = vmatpush1.msra.mxu0 %v292
    %691 = vmatprep.subr.mxu0 0.0
    %692 = vmatpush1.msra.mxu0 %v293
    %693 = vmatprep.subr.mxu0 0.0
    %694 = vmatpush1.msra.mxu0 %v294
    %695 = vmatprep.subr.mxu0 0.0
    %696 = vmatpush1.msra.mxu0 %v295
    %697 = vmatprep.subr.mxu0 0.0
    %698 = vmatpush1.msra.mxu0 %v296
    %699 = vmatprep.subr.mxu0 0.0
    %700 = vmatpush1.msra.mxu0 %v297
    %701 = vmatprep.subr.mxu0 0.0
    %702 = vmatpush1.msra.mxu0 0.0
    %703 = vmatprep.subr.mxu0 0.0
    %704 = vmatpush1.msra.mxu0 0.0
    %705 = vmatprep.subr.mxu0 0.0
    %706 = vmatpush1.msra.mxu0 0.0
    %707 = vmatprep.subr.mxu0 0.0
    %708 = vmatpush1.msra.mxu0 0.0
    %709 = vmatprep.subr.mxu0 0.0
    %710 = vmatpush1.msra.mxu0 0.0
    %711 = vmatprep.subr.mxu0 0.0
    %712 = vmatpush1.msra.mxu0 0.0
    %713 = vmatprep.subr.mxu0 0.0
    %714 = vmatpush1.msra.mxu0 0.0
    %715 = vmatprep.subr.mxu0 0.0
    %716 = vmatpush1.msra.mxu0 0.0
    %717 = vmatprep.subr.mxu0 0.0
    %718 = vmatpush1.msra.mxu0 0.0
    %719 = vmatprep.subr.mxu0 0.0
    %720 = vmatpush1.msra.mxu0 0.0
    %721 = vmatprep.subr.mxu0 0.0
    %722 = vmatpush1.msra.mxu0 0.0
    %723 = vmatprep.subr.mxu0 0.0
    %724 = vmatpush1.msra.mxu0 0.0
    %725 = vmatprep.subr.mxu0 0.0
    %726 = vmatpush1.msra.mxu0 0.0
    %727 = vmatprep.subr.mxu0 0.0
    %728 = vmatpush1.msra.mxu0 0.0
    %729 = vmatprep.subr.mxu0 0.0
    %730 = vmatpush1.msra.mxu0 0.0
    %731 = vmatprep.subr.mxu0 0.0
    %732 = vmatpush1.msra.mxu0 0.0
    %733 = vmatprep.mubr.f32.mxu0 0.0
    %734 = vmatmul.mubr.f32.gmra.mrb[0].mxu0 %v668
    %v735 = vpop.f32.mrb[0].mxu0
    %v736 = vadd.f32 0.0, %v735
    %v737 = vpop.f32.mrb[0].mxu0
    %738 = vdwg.mxu0
    %v739 = vadd.f32 %v525, %v736
    %v740 = vadd.f32 %v739, %v523
    %741 = vmatprep.subr.mxu0 0.0
    %742 = vmatpush1.msra.mxu0 %v249
    %743 = vmatprep.subr.mxu0 0.0
    %744 = vmatpush1.msra.mxu0 %v250
    %745 = vmatprep.subr.mxu0 0.0
    %746 = vmatpush1.msra.mxu0 %v251
    %747 = vmatprep.subr.mxu0 0.0
    %748 = vmatpush1.msra.mxu0 %v252
    %749 = vmatprep.subr.mxu0 0.0
    %750 = vmatpush1.msra.mxu0 %v253
    %751 = vmatprep.subr.mxu0 0.0
    %752 = vmatpush1.msra.mxu0 %v254
    %753 = vmatprep.subr.mxu0 0.0
    %754 = vmatpush1.msra.mxu0 %v255
    %755 = vmatprep.subr.mxu0 0.0
    %756 = vmatpush1.msra.mxu0 %v256
    %757 = vmatprep.subr.mxu0 0.0
    %758 = vmatpush1.msra.mxu0 %v257
    %759 = vmatprep.subr.mxu0 0.0
    %760 = vmatpush1.msra.mxu0 %v258
    %761 = vmatprep.subr.mxu0 0.0
    %762 = vmatpush1.msra.mxu0 %v259
    %763 = vmatprep.subr.mxu0 0.0
    %764 = vmatpush1.msra.mxu0 %v260
    %765 = vmatprep.subr.mxu0 0.0
    %766 = vmatpush1.msra.mxu0 %v261
    %767 = vmatprep.subr.mxu0 0.0
    %768 = vmatpush1.msra.mxu0 %v262
    %769 = vmatprep.subr.mxu0 0.0
    %770 = vmatpush1.msra.mxu0 %v263
    %771 = vmatprep.subr.mxu0 0.0
    %772 = vmatpush1.msra.mxu0 %v264
    %773 = vmatprep.subr.mxu0 0.0
    %774 = vmatpush1.msra.mxu0 0.0
    %775 = vmatprep.subr.mxu0 0.0
    %776 = vmatpush1.msra.mxu0 0.0
    %777 = vmatprep.subr.mxu0 0.0
    %778 = vmatpush1.msra.mxu0 0.0
    %779 = vmatprep.subr.mxu0 0.0
    %780 = vmatpush1.msra.mxu0 0.0
    %781 = vmatprep.subr.mxu0 0.0
    %782 = vmatpush1.msra.mxu0 0.0
    %783 = vmatprep.subr.mxu0 0.0
    %784 = vmatpush1.msra.mxu0 0.0
    %785 = vmatprep.subr.mxu0 0.0
    %786 = vmatpush1.msra.mxu0 0.0
    %787 = vmatprep.subr.mxu0 0.0
    %788 = vmatpush1.msra.mxu0 0.0
    %789 = vmatprep.subr.mxu0 0.0
    %790 = vmatpush1.msra.mxu0 0.0
    %791 = vmatprep.subr.mxu0 0.0
    %792 = vmatpush1.msra.mxu0 0.0
    %793 = vmatprep.subr.mxu0 0.0
    %794 = vmatpush1.msra.mxu0 0.0
    %795 = vmatprep.subr.mxu0 0.0
    %796 = vmatpush1.msra.mxu0 0.0
    %797 = vmatprep.subr.mxu0 0.0
    %798 = vmatpush1.msra.mxu0 0.0
    %799 = vmatprep.subr.mxu0 0.0
    %800 = vmatpush1.msra.mxu0 0.0
    %801 = vmatprep.subr.mxu0 0.0
    %802 = vmatpush1.msra.mxu0 0.0
    %803 = vmatprep.subr.mxu0 0.0
    %804 = vmatpush1.msra.mxu0 0.0
    %805 = vmatprep.mubr.f32.mxu0 0.0
    %806 = vmatmul.mubr.f32.gmra.mrb[0].mxu0 %v740
    %v807 = vpop.f32.mrb[0].mxu0
    %v808 = vadd.f32 0.0, %v807
    %v809 = vpop.f32.mrb[0].mxu0
    %810 = vdwg.mxu0
    %v811 = vadd.f32 %v245, %v808
    %v812 = vmax.f32 %v811, 0.0
    %813 = vmatprep.subr.mxu0 0.0
    %814 = vmatpush1.msra.mxu0 %v265
    %815 = vmatprep.subr.mxu0 0.0
    %816 = vmatpush1.msra.mxu0 %v266
    %817 = vmatprep.subr.mxu0 0.0
    %818 = vmatpush1.msra.mxu0 %v267
    %819 = vmatprep.subr.mxu0 0.0
    %820 = vmatpush1.msra.mxu0 %v268
    %821 = vmatprep.subr.mxu0 0.0
    %822 = vmatpush1.msra.mxu0 %v269
    %823 = vmatprep.subr.mxu0 0.0
    %824 = vmatpush1.msra.mxu0 %v270
    %825 = vmatprep.subr.mxu0 0.0
    %826 = vmatpush1.msra.mxu0 %v271
    %827 = vmatprep.subr.mxu0 0.0
    %828 = vmatpush1.msra.mxu0 %v272
    %829 = vmatprep.subr.mxu0 0.0
    %830 = vmatpush1.msra.mxu0 %v273
    %831 = vmatprep.subr.mxu0 0.0
    %832 = vmatpush1.msra.mxu0 %v274
    %833 = vmatprep.subr.mxu0 0.0
    %834 = vmatpush1.msra.mxu0 %v275
    %835 = vmatprep.subr.mxu0 0.0
    %836 = vmatpush1.msra.mxu0 %v276
    %837 = vmatprep.subr.mxu0 0.0
    %838 = vmatpush1.msra.mxu0 %v277
    %839 = vmatprep.subr.mxu0 0.0
    %840 = vmatpush1.msra.mxu0 %v278
    %841 = vmatprep.subr.mxu0 0.0
    %842 = vmatpush1.msra.mxu0 %v279
    %843 = vmatprep.subr.mxu0 0.0
    %844 = vmatpush1.msra.mxu0 %v280
    %845 = vmatprep.subr.mxu0 0.0
    %846 = vmatpush1.msra.mxu0 0.0
    %847 = vmatprep.subr.mxu0 0.0
    %848 = vmatpush1.msra.mxu0 0.0
    %849 = vmatprep.subr.mxu0 0.0
    %850 = vmatpush1.msra.mxu0 0.0
    %851 = vmatprep.subr.mxu0 0.0
    %852 = vmatpush1.msra.mxu0 0.0
    %853 = vmatprep.subr.mxu0 0.0
    %854 = vmatpush1.msra.mxu0 0.0
    %855 = vmatprep.subr.mxu0 0.0
    %856 = vmatpush1.msra.mxu0 0.0
    %857 = vmatprep.subr.mxu0 0.0
    %858 = vmatpush1.msra.mxu0 0.0
    %859 = vmatprep.subr.mxu0 0.0
    %860 = vmatpush1.msra.mxu0 0.0
    %861 = vmatprep.subr.mxu0 0.0
    %862 = vmatpush1.msra.mxu0 0.0
    %863 = vmatprep.subr.mxu0 0.0
    %864 = vmatpush1.msra.mxu0 0.0
    %865 = vmatprep.subr.mxu0 0.0
    %866 = vmatpush1.msra.mxu0 0.0
    %867 = vmatprep.subr.mxu0 0.0
    %868 = vmatpush1.msra.mxu0 0.0
    %869 = vmatprep.subr.mxu0 0.0
    %870 = vmatpush1.msra.mxu0 0.0
    %871 = vmatprep.subr.mxu0 0.0
    %872 = vmatpush1.msra.mxu0 0.0
    %873 = vmatprep.subr.mxu0 0.0
    %874 = vmatpush1.msra.mxu0 0.0
    %875 = vmatprep.subr.mxu0 0.0
    %876 = vmatpush1.msra.mxu0 0.0
    %877 = vmatprep.mubr.f32.mxu0 0.0
    %878 = vmatmul.mubr.f32.gmra.mrb[0].mxu0 %v812
    %v879 = vpop.f32.mrb[0].mxu0
    %v880 = vadd.f32 %v375, %v879
    %v881 = vpop.f32.mrb[0].mxu0
    %882 = vdwg.mxu0
    %v883 = vmax.f32 %v880, 0.0
    %884 = vmatprep.subr.mxu0 0.0
    %885 = vmatpush1.msra.mxu0 %v282
    %886 = vmatprep.subr.mxu0 0.0
    %887 = vmatpush1.msra.mxu0 %v283
    %888 = vmatprep.subr.mxu0 0.0
    %889 = vmatpush1.msra.mxu0 %v284
    %890 = vmatprep.subr.mxu0 0.0
    %891 = vmatpush1.msra.mxu0 %v285
    %892 = vmatprep.subr.mxu0 0.0
    %893 = vmatpush1.msra.mxu0 %v286
    %894 = vmatprep.subr.mxu0 0.0
    %895 = vmatpush1.msra.mxu0 %v287
    %896 = vmatprep.subr.mxu0 0.0
    %897 = vmatpush1.msra.mxu0 %v288
    %898 = vmatprep.subr.mxu0 0.0
    %899 = vmatpush1.msra.mxu0 %v289
    %900 = vmatprep.subr.mxu0 0.0
    %901 = vmatpush1.msra.mxu0 %v290
    %902 = vmatprep.subr.mxu0 0.0
    %903 = vmatpush1.msra.mxu0 %v291
    %904 = vmatprep.subr.mxu0 0.0
    %905 = vmatpush1.msra.mxu0 %v292
    %906 = vmatprep.subr.mxu0 0.0
    %907 = vmatpush1.msra.mxu0 %v293
    %908 = vmatprep.subr.mxu0 0.0
    %909 = vmatpush1.msra.mxu0 %v294
    %910 = vmatprep.subr.mxu0 0.0
    %911 = vmatpush1.msra.mxu0 %v295
    %912 = vmatprep.subr.mxu0 0.0
    %913 = vmatpush1.msra.mxu0 %v296
    %914 = vmatprep.subr.mxu0 0.0
    %915 = vmatpush1.msra.mxu0 %v297
    %916 = vmatprep.subr.mxu0 0.0
    %917 = vmatpush1.msra.mxu0 0.0
    %918 = vmatprep.subr.mxu0 0.0
    %919 = vmatpush1.msra.mxu0 0.0
    %920 = vmatprep.subr.mxu0 0.0
    %921 = vmatpush1.msra.mxu0 0.0
    %922 = vmatprep.subr.mxu0 0.0
    %923 = vmatpush1.msra.mxu0 0.0
    %924 = vmatprep.subr.mxu0 0.0
    %925 = vmatpush1.msra.mxu0 0.0
    %926 = vmatprep.subr.mxu0 0.0
    %927 = vmatpush1.msra.mxu0 0.0
    %928 = vmatprep.subr.mxu0 0.0
    %929 = vmatpush1.msra.mxu0 0.0
    %930 = vmatprep.subr.mxu0 0.0
    %931 = vmatpush1.msra.mxu0 0.0
    %932 = vmatprep.subr.mxu0 0.0
    %933 = vmatpush1.msra.mxu0 0.0
    %934 = vmatprep.subr.mxu0 0.0
    %935 = vmatpush1.msra.mxu0 0.0
    %936 = vmatprep.subr.mxu0 0.0
    %937 = vmatpush1.msra.mxu0 0.0
    %938 = vmatprep.subr.mxu0 0.0
    %939 = vmatpush1.msra.mxu0 0.0
    %940 = vmatprep.subr.mxu0 0.0
    %941 = vmatpush1.msra.mxu0 0.0
    %942 = vmatprep.subr.mxu0 0.0
    %943 = vmatpush1.msra.mxu0 0.0
    %944 = vmatprep.subr.mxu0 0.0
    %945 = vmatpush1.msra.mxu0 0.0
    %946 = vmatprep.subr.mxu0 0.0
    %947 = vmatpush1.msra.mxu0 0.0
    %948 = vmatprep.mubr.f32.mxu0 0.0
    %949 = vmatmul.mubr.f32.gmra.mrb[0].mxu0 %v883
    %v950 = vpop.f32.mrb[0].mxu0
    %v951 = vadd.f32 0.0, %v950
    %v952 = vpop.f32.mrb[0].mxu0
    %953 = vdwg.mxu0
    %v954 = vadd.f32 %v740, %v951
    %v955 = vadd.f32 %v954, %v523
    %956 = vst [vmem:[%s10] sm:$0xff] %v955
    %v957 = vld [vmem:[#allocation13] sm:$0xff]
    %v958 = vld [vmem:[#allocation13 + $0x8] sm:$0xff]
    %v959 = vld [vmem:[#allocation13 + $0x10] sm:$0xff]
    %v960 = vld [vmem:[#allocation13 + $0x18] sm:$0xff]
    %v961 = vld [vmem:[#allocation13 + $0x20] sm:$0xff]
    %v962 = vld [vmem:[#allocation13 + $0x28] sm:$0xff]
    %v963 = vld [vmem:[#allocation13 + $0x30] sm:$0xff]
    %v964 = vld [vmem:[#allocation13 + $0x38] sm:$0xff]
    %v965 = vld [vmem:[#allocation13 + $0x40] sm:$0xff]
    %v966 = vld [vmem:[#allocation13 + $0x48] sm:$0xff]
    %v967 = vld [vmem:[#allocation13 + $0x50] sm:$0xff]
    %v968 = vld [vmem:[#allocation13 + $0x58] sm:$0xff]
    %v969 = vld [vmem:[#allocation13 + $0x60] sm:$0xff]
    %v970 = vld [vmem:[#allocation13 + $0x68] sm:$0xff]
    %v971 = vld [vmem:[#allocation13 + $0x70] sm:$0xff]
    %v972 = vld [vmem:[#allocation13 + $0x78] sm:$0xff]
    %v973 = vld [vmem:[#allocation13 + $0x80] sm:$0xff]
    %v974 = vld [vmem:[#allocation13 + $0x88] sm:$0xff]
    %v975 = vld [vmem:[#allocation13 + $0x90] sm:$0xff]
    %v976 = vld [vmem:[#allocation13 + $0x98] sm:$0xff]
    %v977 = vld [vmem:[#allocation13 + $0xa0] sm:$0xff]
    %v978 = vld [vmem:[#allocation13 + $0xa8] sm:$0xff]
    %v979 = vld [vmem:[#allocation13 + $0xb0] sm:$0xff]
    %v980 = vld [vmem:[#allocation13 + $0xb8] sm:$0xff]
    %v981 = vld [vmem:[#allocation13 + $0xc0] sm:$0xff]
    %v982 = vld [vmem:[#allocation13 + $0xc8] sm:$0xff]
    %v983 = vld [vmem:[#allocation13 + $0xd0] sm:$0xff]
    %v984 = vld [vmem:[#allocation13 + $0xd8] sm:$0xff]
    %v985 = vld [vmem:[#allocation13 + $0xe0] sm:$0xff]
    %v986 = vld [vmem:[#allocation13 + $0xe8] sm:$0xff]
    %v987 = vld [vmem:[#allocation13 + $0xf0] sm:$0xff]
    %v988 = vld [vmem:[#allocation13 + $0xf8] sm:$0xff]
    %v989 = vld [vmem:[#allocation13 + $0x100] sm:$0xff]
    %v990 = vld [vmem:[#allocation13 + $0x108] sm:$0xff]
    %v991 = vld [vmem:[#allocation13 + $0x110] sm:$0xff]
    %v992 = vld [vmem:[#allocation13 + $0x118] sm:$0xff]
    %v993 = vld [vmem:[#allocation13 + $0x120] sm:$0xff]
    %v994 = vld [vmem:[#allocation13 + $0x128] sm:$0xff]
    %v995 = vld [vmem:[#allocation13 + $0x130] sm:$0xff]
    %v996 = vld [vmem:[#allocation13 + $0x138] sm:$0xff]
    %v997 = vld [vmem:[#allocation13 + $0x140] sm:$0xff]
    %v998 = vld [vmem:[#allocation13 + $0x148] sm:$0xff]
    %v999 = vld [vmem:[#allocation13 + $0x150] sm:$0xff]
    %v1000 = vld [vmem:[#allocation13 + $0x158] sm:$0xff]
    %v1001 = vld [vmem:[#allocation13 + $0x160] sm:$0xff]
    %v1002 = vld [vmem:[#allocation13 + $0x168] sm:$0xff]
    %v1003 = vld [vmem:[#allocation13 + $0x170] sm:$0xff]
    %v1004 = vld [vmem:[#allocation13 + $0x178] sm:$0xff]
    %v1005 = vld [vmem:[#allocation13 + $0x180] sm:$0xff]
    %v1006 = vld [vmem:[#allocation13 + $0x188] sm:$0xff]
    %v1007 = vld [vmem:[#allocation13 + $0x190] sm:$0xff]
    %v1008 = vld [vmem:[#allocation13 + $0x198] sm:$0xff]
    %v1009 = vld [vmem:[#allocation13 + $0x1a0] sm:$0xff]
    %v1010 = vld [vmem:[#allocation13 + $0x1a8] sm:$0xff]
    %v1011 = vld [vmem:[#allocation13 + $0x1b0] sm:$0xff]
    %v1012 = vld [vmem:[#allocation13 + $0x1b8] sm:$0xff]
    %v1013 = vld [vmem:[#allocation13 + $0x1c0] sm:$0xff]
    %v1014 = vld [vmem:[#allocation13 + $0x1c8] sm:$0xff]
    %v1015 = vld [vmem:[#allocation13 + $0x1d0] sm:$0xff]
    %v1016 = vld [vmem:[#allocation13 + $0x1d8] sm:$0xff]
    %v1017 = vld [vmem:[#allocation13 + $0x1e0] sm:$0xff]
    %v1018 = vld [vmem:[#allocation13 + $0x1e8] sm:$0xff]
    %v1019 = vld [vmem:[#allocation13 + $0x1f0] sm:$0xff]
    %v1020 = vld [vmem:[#allocation13 + $0x1f8] sm:$0xff]
    %v1021 = vld [vmem:[#allocation13 + $0x200] sm:$0xff]
    %v1022 = vld [vmem:[#allocation13 + $0x208] sm:$0xff]
    %v1023 = vld [vmem:[#allocation13 + $0x210] sm:$0xff]
    %v1024 = vld [vmem:[#allocation13 + $0x218] sm:$0xff]
    %v1025 = vld [vmem:[#allocation13 + $0x220] sm:$0xff]
    %v1026 = vld [vmem:[#allocation13 + $0x228] sm:$0xff]
    %v1027 = vld [vmem:[#allocation13 + $0x230] sm:$0xff]
    %v1028 = vld [vmem:[#allocation13 + $0x238] sm:$0xff]
    %v1029 = vld [vmem:[#allocation13 + $0x240] sm:$0xff]
    %v1030 = vld [vmem:[#allocation13 + $0x248] sm:$0xff]
    %v1031 = vld [vmem:[#allocation13 + $0x250] sm:$0xff]
    %v1032 = vld [vmem:[#allocation13 + $0x258] sm:$0xff]
    %v1033 = vld [vmem:[#allocation13 + $0x260] sm:$0xff]
    %v1034 = vld [vmem:[#allocation13 + $0x268] sm:$0xff]
    %v1035 = vld [vmem:[#allocation13 + $0x270] sm:$0xff]
    %v1036 = vld [vmem:[#allocation13 + $0x278] sm:$0xff]
    %v1037 = vld [vmem:[#allocation13 + $0x280] sm:$0xff]
    %v1038 = vld [vmem:[#allocation13 + $0x288] sm:$0xff]
    %v1039 = vld [vmem:[#allocation13 + $0x290] sm:$0xff]
    %v1040 = vld [vmem:[#allocation13 + $0x298] sm:$0xff]
    %v1041 = vld [vmem:[#allocation13 + $0x2a0] sm:$0xff]
    %v1042 = vld [vmem:[#allocation13 + $0x2a8] sm:$0xff]
    %v1043 = vld [vmem:[#allocation13 + $0x2b0] sm:$0xff]
    %v1044 = vld [vmem:[#allocation13 + $0x2b8] sm:$0xff]
    %v1045 = vld [vmem:[#allocation13 + $0x2c0] sm:$0xff]
    %v1046 = vld [vmem:[#allocation13 + $0x2c8] sm:$0xff]
    %v1047 = vld [vmem:[#allocation13 + $0x2d0] sm:$0xff]
    %v1048 = vld [vmem:[#allocation13 + $0x2d8] sm:$0xff]
    %v1049 = vld [vmem:[#allocation13 + $0x2e0] sm:$0xff]
    %v1050 = vld [vmem:[#allocation13 + $0x2e8] sm:$0xff]
    %v1051 = vld [vmem:[#allocation13 + $0x2f0] sm:$0xff]
    %v1052 = vld [vmem:[#allocation13 + $0x2f8] sm:$0xff]
    %1053 = vmatprep.subr.mxu0 %v958
    %1054 = vmatpush1.msra.mxu0 %v957
    %1055 = vmatprep.subr.mxu0 %v964
    %1056 = vmatpush1.msra.mxu0 %v963
    %1057 = vmatprep.subr.mxu0 %v970
    %1058 = vmatpush1.msra.mxu0 %v969
    %1059 = vmatprep.subr.mxu0 %v976
    %1060 = vmatpush1.msra.mxu0 %v975
    %1061 = vmatprep.subr.mxu0 %v982
    %1062 = vmatpush1.msra.mxu0 %v981
    %1063 = vmatprep.subr.mxu0 %v988
    %1064 = vmatpush1.msra.mxu0 %v987
    %1065 = vmatprep.subr.mxu0 %v994
    %1066 = vmatpush1.msra.mxu0 %v993
    %1067 = vmatprep.subr.mxu0 %v1000
    %1068 = vmatpush1.msra.mxu0 %v999
    %1069 = vmatprep.subr.mxu0 %v1006
    %1070 = vmatpush1.msra.mxu0 %v1005
    %1071 = vmatprep.subr.mxu0 %v1012
    %1072 = vmatpush1.msra.mxu0 %v1011
    %1073 = vmatprep.subr.mxu0 %v1018
    %1074 = vmatpush1.msra.mxu0 %v1017
    %1075 = vmatprep.subr.mxu0 %v1024
    %1076 = vmatpush1.msra.mxu0 %v1023
    %1077 = vmatprep.subr.mxu0 %v1030
    %1078 = vmatpush1.msra.mxu0 %v1029
    %1079 = vmatprep.subr.mxu0 %v1036
    %1080 = vmatpush1.msra.mxu0 %v1035
    %1081 = vmatprep.subr.mxu0 %v1042
    %1082 = vmatpush1.msra.mxu0 %v1041
    %1083 = vmatprep.subr.mxu0 %v1048
    %1084 = vmatpush1.msra.mxu0 %v1047
    %1085 = vmatprep.subr.mxu0 0.0
    %1086 = vmatpush1.msra.mxu0 0.0
    %1087 = vmatprep.subr.mxu0 0.0
    %1088 = vmatpush1.msra.mxu0 0.0
    %1089 = vmatprep.subr.mxu0 0.0
    %1090 = vmatpush1.msra.mxu0 0.0
    %1091 = vmatprep.subr.mxu0 0.0
    %1092 = vmatpush1.msra.mxu0 0.0
    %1093 = vmatprep.subr.mxu0 0.0
    %1094 = vmatpush1.msra.mxu0 0.0
    %1095 = vmatprep.subr.mxu0 0.0
    %1096 = vmatpush1.msra.mxu0 0.0
    %1097 = vmatprep.subr.mxu0 0.0
    %1098 = vmatpush1.msra.mxu0 0.0
    %1099 = vmatprep.subr.mxu0 0.0
    %1100 = vmatpush1.msra.mxu0 0.0
    %1101 = vmatprep.subr.mxu0 0.0
    %1102 = vmatpush1.msra.mxu0 0.0
    %1103 = vmatprep.subr.mxu0 0.0
    %1104 = vmatpush1.msra.mxu0 0.0
    %1105 = vmatprep.subr.mxu0 0.0
    %1106 = vmatpush1.msra.mxu0 0.0
    %1107 = vmatprep.subr.mxu0 0.0
    %1108 = vmatpush1.msra.mxu0 0.0
    %1109 = vmatprep.subr.mxu0 0.0
    %1110 = vmatpush1.msra.mxu0 0.0
    %1111 = vmatprep.subr.mxu0 0.0
    %1112 = vmatpush1.msra.mxu0 0.0
    %1113 = vmatprep.subr.mxu0 0.0
    %1114 = vmatpush1.msra.mxu0 0.0
    %1115 = vmatprep.subr.mxu0 0.0
    %1116 = vmatpush1.msra.mxu0 0.0
    %1117 = vmatprep.mubr.f32.mxu0 0.0
    %1118 = vmatmul.mubr.f32.gmra.mrb[0].mxu0 %v955
    %v1119 = vpop.f32.mrb[0].mxu0
    %v1120 = vadd.f32 0.0, %v1119
    %v1121 = vpop.f32.mrb[0].mxu0
    %v1122 = vadd.f32 0.0, %v1121
    %1123 = vdwg.mxu0
    %1124 = vmatprep.subr.mxu0 %v960
    %1125 = vmatpush1.msra.mxu0 %v959
    %1126 = vmatprep.subr.mxu0 %v966
    %1127 = vmatpush1.msra.mxu0 %v965
    %1128 = vmatprep.subr.mxu0 %v972
    %1129 = vmatpush1.msra.mxu0 %v971
    %1130 = vmatprep.subr.mxu0 %v978
    %1131 = vmatpush1.msra.mxu0 %v977
    %1132 = vmatprep.subr.mxu0 %v984
    %1133 = vmatpush1.msra.mxu0 %v983
    %1134 = vmatprep.subr.mxu0 %v990
    %1135 = vmatpush1.msra.mxu0 %v989
    %1136 = vmatprep.subr.mxu0 %v996
    %1137 = vmatpush1.msra.mxu0 %v995
    %1138 = vmatprep.subr.mxu0 %v1002
    %1139 = vmatpush1.msra.mxu0 %v1001
    %1140 = vmatprep.subr.mxu0 %v1008
    %1141 = vmatpush1.msra.mxu0 %v1007
    %1142 = vmatprep.subr.mxu0 %v1014
    %1143 = vmatpush1.msra.mxu0 %v1013
    %1144 = vmatprep.subr.mxu0 %v1020
    %1145 = vmatpush1.msra.mxu0 %v1019
    %1146 = vmatprep.subr.mxu0 %v1026
    %1147 = vmatpush1.msra.mxu0 %v1025
    %1148 = vmatprep.subr.mxu0 %v1032
    %1149 = vmatpush1.msra.mxu0 %v1031
    %1150 = vmatprep.subr.mxu0 %v1038
    %1151 = vmatpush1.msra.mxu0 %v1037
    %1152 = vmatprep.subr.mxu0 %v1044
    %1153 = vmatpush1.msra.mxu0 %v1043
    %1154 = vmatprep.subr.mxu0 %v1050
    %1155 = vmatpush1.msra.mxu0 %v1049
    %1156 = vmatprep.subr.mxu0 0.0
    %1157 = vmatpush1.msra.mxu0 0.0
    %1158 = vmatprep.subr.mxu0 0.0
    %1159 = vmatpush1.msra.mxu0 0.0
    %1160 = vmatprep.subr.mxu0 0.0
    %1161 = vmatpush1.msra.mxu0 0.0
    %1162 = vmatprep.subr.mxu0 0.0
    %1163 = vmatpush1.msra.mxu0 0.0
    %1164 = vmatprep.subr.mxu0 0.0
    %1165 = vmatpush1.msra.mxu0 0.0
    %1166 = vmatprep.subr.mxu0 0.0
    %1167 = vmatpush1.msra.mxu0 0.0
    %1168 = vmatprep.subr.mxu0 0.0
    %1169 = vmatpush1.msra.mxu0 0.0
    %1170 = vmatprep.subr.mxu0 0.0
    %1171 = vmatpush1.msra.mxu0 0.0
    %1172 = vmatprep.subr.mxu0 0.0
    %1173 = vmatpush1.msra.mxu0 0.0
    %1174 = vmatprep.subr.mxu0 0.0
    %1175 = vmatpush1.msra.mxu0 0.0
    %1176 = vmatprep.subr.mxu0 0.0
    %1177 = vmatpush1.msra.mxu0 0.0
    %1178 = vmatprep.subr.mxu0 0.0
    %1179 = vmatpush1.msra.mxu0 0.0
    %1180 = vmatprep.subr.mxu0 0.0
    %1181 = vmatpush1.msra.mxu0 0.0
    %1182 = vmatprep.subr.mxu0 0.0
    %1183 = vmatpush1.msra.mxu0 0.0
    %1184 = vmatprep.subr.mxu0 0.0
    %1185 = vmatpush1.msra.mxu0 0.0
    %1186 = vmatprep.subr.mxu0 0.0
    %1187 = vmatpush1.msra.mxu0 0.0
    %1188 = vmatprep.mubr.f32.mxu0 0.0
    %1189 = vmatmul.mubr.f32.gmra.mrb[0].mxu0 %v955
    %v1190 = vpop.f32.mrb[0].mxu0
    %v1191 = vadd.f32 0.0, %v1190
    %v1192 = vpop.f32.mrb[0].mxu0
    %v1193 = vadd.f32 0.0, %v1192
    %1194 = vdwg.mxu0
    %1195 = vmatprep.subr.mxu0 %v962
    %1196 = vmatpush1.msra.mxu0 %v961
    %1197 = vmatprep.subr.mxu0 %v968
    %1198 = vmatpush1.msra.mxu0 %v967
    %1199 = vmatprep.subr.mxu0 %v974
    %1200 = vmatpush1.msra.mxu0 %v973
    %1201 = vmatprep.subr.mxu0 %v980
    %1202 = vmatpush1.msra.mxu0 %v979
    %1203 = vmatprep.subr.mxu0 %v986
    %1204 = vmatpush1.msra.mxu0 %v985
    %1205 = vmatprep.subr.mxu0 %v992
    %1206 = vmatpush1.msra.mxu0 %v991
    %1207 = vmatprep.subr.mxu0 %v998
    %1208 = vmatpush1.msra.mxu0 %v997
    %1209 = vmatprep.subr.mxu0 %v1004
    %1210 = vmatpush1.msra.mxu0 %v1003
    %1211 = vmatprep.subr.mxu0 %v1010
    %1212 = vmatpush1.msra.mxu0 %v1009
    %1213 = vmatprep.subr.mxu0 %v1016
    %1214 = vmatpush1.msra.mxu0 %v1015
    %1215 = vmatprep.subr.mxu0 %v1022
    %1216 = vmatpush1.msra.mxu0 %v1021
    %1217 = vmatprep.subr.mxu0 %v1028
    %1218 = vmatpush1.msra.mxu0 %v1027
    %1219 = vmatprep.subr.mxu0 %v1034
    %1220 = vmatpush1.msra.mxu0 %v1033
    %1221 = vmatprep.subr.mxu0 %v1040
    %1222 = vmatpush1.msra.mxu0 %v1039
    %1223 = vmatprep.subr.mxu0 %v1046
    %1224 = vmatpush1.msra.mxu0 %v1045
    %1225 = vmatprep.subr.mxu0 %v1052
    %1226 = vmatpush1.msra.mxu0 %v1051
    %1227 = vmatprep.subr.mxu0 0.0
    %1228 = vmatpush1.msra.mxu0 0.0
    %1229 = vmatprep.subr.mxu0 0.0
    %1230 = vmatpush1.msra.mxu0 0.0
    %1231 = vmatprep.subr.mxu0 0.0
    %1232 = vmatpush1.msra.mxu0 0.0
    %1233 = vmatprep.subr.mxu0 0.0
    %1234 = vmatpush1.msra.mxu0 0.0
    %1235 = vmatprep.subr.mxu0 0.0
    %1236 = vmatpush1.msra.mxu0 0.0
    %1237 = vmatprep.subr.mxu0 0.0
    %1238 = vmatpush1.msra.mxu0 0.0
    %1239 = vmatprep.subr.mxu0 0.0
    %1240 = vmatpush1.msra.mxu0 0.0
    %1241 = vmatprep.subr.mxu0 0.0
    %1242 = vmatpush1.msra.mxu0 0.0
    %1243 = vmatprep.subr.mxu0 0.0
    %1244 = vmatpush1.msra.mxu0 0.0
    %1245 = vmatprep.subr.mxu0 0.0
    %1246 = vmatpush1.msra.mxu0 0.0
    %1247 = vmatprep.subr.mxu0 0.0
    %1248 = vmatpush1.msra.mxu0 0.0
    %1249 = vmatprep.subr.mxu0 0.0
    %1250 = vmatpush1.msra.mxu0 0.0
    %1251 = vmatprep.subr.mxu0 0.0
    %1252 = vmatpush1.msra.mxu0 0.0
    %1253 = vmatprep.subr.mxu0 0.0
    %1254 = vmatpush1.msra.mxu0 0.0
    %1255 = vmatprep.subr.mxu0 0.0
    %1256 = vmatpush1.msra.mxu0 0.0
    %1257 = vmatprep.subr.mxu0 0.0
    %1258 = vmatpush1.msra.mxu0 0.0
    %1259 = vmatprep.mubr.f32.mxu0 0.0
    %1260 = vmatmul.mubr.f32.gmra.mrb[0].mxu0 %v955
    %v1261 = vpop.f32.mrb[0].mxu0
    %v1262 = vadd.f32 0.0, %v1261
    %v1263 = vpop.f32.mrb[0].mxu0
    %v1264 = vadd.f32 0.0, %v1263
    %1265 = vdwg.mxu0
    %v1266 = vmul.f32 %v1120, %v1120
    %v1267 = vmul.f32 %v1122, %v1122
    %v1268 = vadd.f32 %v1266, %v1267
    %v1269 = vmul.f32 %v1191, %v1191
    %v1270 = vadd.f32 %v1268, %v1269
    %v1271 = vmax.f32 %v1270, 1e-24
    %v1272 = vrsqrt.pop %v1271
    %v1273 = vmul.f32 %v1120, %v1272
    %v1274 = vmul.f32 %v1122, %v1272
    %v1275 = vmul.f32 %v1191, %v1272
    %v1276 = vmul.f32 %v1273, %v1193
    %v1277 = vmul.f32 %v1274, %v1262
    %v1278 = vadd.f32 %v1276, %v1277
    %v1279 = vmul.f32 %v1275, %v1264
    %v1280 = vadd.f32 %v1278, %v1279
    %v1281 = vmul.f32 %v1280, %v1273
    %v1282 = vsub.f32 %v1193, %v1281
    %v1283 = vmul.f32 %v1280, %v1274
    %v1284 = vsub.f32 %v1262, %v1283
    %v1285 = vmul.f32 %v1280, %v1275
    %v1286 = vsub.f32 %v1264, %v1285
    %v1287 = vmul.f32 %v1282, %v1282
    %v1288 = vmul.f32 %v1284, %v1284
    %v1289 = vadd.f32 %v1287, %v1288
    %v1290 = vmul.f32 %v1286, %v1286
    %v1291 = vadd.f32 %v1289, %v1290
    %v1292 = vmax.f32 %v1291, 1e-24
    %v1293 = vrsqrt.pop %v1292
    %v1294 = vmul.f32 %v1282, %v1293
    %v1295 = vmul.f32 %v1284, %v1293
    %v1296 = vmul.f32 %v1286, %v1293
    %v1297 = vmul.f32 %v1274, %v1296
    %v1298 = vmul.f32 %v1275, %v1295
    %v1299 = vsub.f32 %v1297, %v1298
    %v1300 = vmul.f32 %v1275, %v1294
    %v1301 = vmul.f32 %v1273, %v1296
    %v1302 = vsub.f32 %v1300, %v1301
    %v1303 = vmul.f32 %v1273, %v1295
    %v1304 = vmul.f32 %v1274, %v1294
    %v1305 = vsub.f32 %v1303, %v1304
    %v1306 = vld [vmem:[#allocation15] sm:$0xff]
    %v1307 = vld [vmem:[#allocation15 + $0x8] sm:$0xff]
    %v1308 = vld [vmem:[#allocation15 + $0x10] sm:$0xff]
    %v1309 = vld [vmem:[#allocation15 + $0x18] sm:$0xff]
    %v1310 = vld [vmem:[#allocation15 + $0x20] sm:$0xff]
    %v1311 = vld [vmem:[#allocation15 + $0x28] sm:$0xff]
    %v1312 = vld [vmem:[#allocation15 + $0x30] sm:$0xff]
    %v1313 = vld [vmem:[#allocation15 + $0x38] sm:$0xff]
    %v1314 = vld [vmem:[#allocation15 + $0x40] sm:$0xff]
    %v1315 = vld [vmem:[#allocation15 + $0x48] sm:$0xff]
    %v1316 = vld [vmem:[#allocation15 + $0x50] sm:$0xff]
    %v1317 = vld [vmem:[#allocation15 + $0x58] sm:$0xff]
    %v1318 = vld [vmem:[#allocation15 + $0x60] sm:$0xff]
    %v1319 = vld [vmem:[#allocation15 + $0x68] sm:$0xff]
    %v1320 = vld [vmem:[#allocation15 + $0x70] sm:$0xff]
    %v1321 = vld [vmem:[#allocation15 + $0x78] sm:$0xff]
    %v1322 = vld [vmem:[#allocation15 + $0x80] sm:$0xff]
    %v1323 = vld [vmem:[#allocation15 + $0x88] sm:$0xff]
    %v1324 = vld [vmem:[#allocation15 + $0x90] sm:$0xff]
    %v1325 = vld [vmem:[#allocation15 + $0x98] sm:$0xff]
    %v1326 = vld [vmem:[#allocation15 + $0xa0] sm:$0xff]
    %v1327 = vld [vmem:[#allocation15 + $0xa8] sm:$0xff]
    %v1328 = vld [vmem:[#allocation15 + $0xb0] sm:$0xff]
    %v1329 = vld [vmem:[#allocation15 + $0xb8] sm:$0xff]
    %v1330 = vld [vmem:[#allocation15 + $0xc0] sm:$0xff]
    %v1331 = vld [vmem:[#allocation15 + $0xc8] sm:$0xff]
    %v1332 = vld [vmem:[#allocation15 + $0xd0] sm:$0xff]
    %v1333 = vld [vmem:[#allocation15 + $0xd8] sm:$0xff]
    %v1334 = vld [vmem:[#allocation15 + $0xe0] sm:$0xff]
    %v1335 = vld [vmem:[#allocation15 + $0xe8] sm:$0xff]
    %v1336 = vld [vmem:[#allocation15 + $0xf0] sm:$0xff]
    %v1337 = vld [vmem:[#allocation15 + $0xf8] sm:$0xff]
    %v1338 = vld [vmem:[#allocation15 + $0x100] sm:$0xff]
    %v1339 = vld [vmem:[#allocation15 + $0x108] sm:$0xff]
    %v1340 = vld [vmem:[#allocation15 + $0x110] sm:$0xff]
    %v1341 = vld [vmem:[#allocation15 + $0x118] sm:$0xff]
    %v1342 = vld [vmem:[#allocation15 + $0x120] sm:$0xff]
    %v1343 = vld [vmem:[#allocation15 + $0x128] sm:$0xff]
    %v1344 = vld [vmem:[#allocation15 + $0x130] sm:$0xff]
    %v1345 = vld [vmem:[#allocation15 + $0x138] sm:$0xff]
    %v1346 = vld [vmem:[#allocation15 + $0x140] sm:$0xff]
    %v1347 = vld [vmem:[#allocation15 + $0x148] sm:$0xff]
    %v1348 = vld [vmem:[#allocation15 + $0x150] sm:$0xff]
    %v1349 = vld [vmem:[#allocation15 + $0x158] sm:$0xff]
    %v1350 = vld [vmem:[#allocation15 + $0x160] sm:$0xff]
    %v1351 = vld [vmem:[#allocation15 + $0x168] sm:$0xff]
    %v1352 = vld [vmem:[#allocation15 + $0x170] sm:$0xff]
    %v1353 = vld [vmem:[#allocation15 + $0x178] sm:$0xff]
    %v1354 = vld [vmem:[#allocation15 + $0x180] sm:$0xff]
    %v1355 = vld [vmem:[#allocation15 + $0x188] sm:$0xff]
    %v1356 = vld [vmem:[#allocation15 + $0x190] sm:$0xff]
    %v1357 = vld [vmem:[#allocation15 + $0x198] sm:$0xff]
    %v1358 = vld [vmem:[#allocation15 + $0x1a0] sm:$0xff]
    %v1359 = vld [vmem:[#allocation15 + $0x1a8] sm:$0xff]
    %v1360 = vld [vmem:[#allocation15 + $0x1b0] sm:$0xff]
    %v1361 = vld [vmem:[#allocation15 + $0x1b8] sm:$0xff]
    %v1362 = vld [vmem:[#allocation15 + $0x1c0] sm:$0xff]
    %v1363 = vld [vmem:[#allocation15 + $0x1c8] sm:$0xff]
    %v1364 = vld [vmem:[#allocation15 + $0x1d0] sm:$0xff]
    %v1365 = vld [vmem:[#allocation15 + $0x1d8] sm:$0xff]
    %v1366 = vld [vmem:[#allocation15 + $0x1e0] sm:$0xff]
    %v1367 = vld [vmem:[#allocation15 + $0x1e8] sm:$0xff]
    %v1368 = vld [vmem:[#allocation15 + $0x1f0] sm:$0xff]
    %v1369 = vld [vmem:[#allocation15 + $0x1f8] sm:$0xff]
    %v1370 = vld [vmem:[#allocation15 + $0x200] sm:$0xff]
    %v1371 = vld [vmem:[#allocation15 + $0x208] sm:$0xff]
    %v1372 = vld [vmem:[#allocation15 + $0x210] sm:$0xff]
    %v1373 = vld [vmem:[#allocation15 + $0x218] sm:$0xff]
    %v1374 = vld [vmem:[#allocation15 + $0x220] sm:$0xff]
    %v1375 = vld [vmem:[#allocation15 + $0x228] sm:$0xff]
    %v1376 = vld [vmem:[#allocation15 + $0x230] sm:$0xff]
    %v1377 = vld [vmem:[#allocation15 + $0x238] sm:$0xff]
    %v1378 = vld [vmem:[#allocation15 + $0x240] sm:$0xff]
    %v1379 = vld [vmem:[#allocation15 + $0x248] sm:$0xff]
    %v1380 = vld [vmem:[#allocation15 + $0x250] sm:$0xff]
    %v1381 = vld [vmem:[#allocation15 + $0x258] sm:$0xff]
    %v1382 = vld [vmem:[#allocation15 + $0x260] sm:$0xff]
    %v1383 = vld [vmem:[#allocation15 + $0x268] sm:$0xff]
    %v1384 = vld [vmem:[#allocation15 + $0x270] sm:$0xff]
    %v1385 = vld [vmem:[#allocation15 + $0x278] sm:$0xff]
    %v1386 = vld [vmem:[#allocation15 + $0x280] sm:$0xff]
    %v1387 = vld [vmem:[#allocation15 + $0x288] sm:$0xff]
    %v1388 = vld [vmem:[#allocation15 + $0x290] sm:$0xff]
    %v1389 = vld [vmem:[#allocation15 + $0x298] sm:$0xff]
    %v1390 = vld [vmem:[#allocation15 + $0x2a0] sm:$0xff]
    %v1391 = vld [vmem:[#allocation15 + $0x2a8] sm:$0xff]
    %v1392 = vld [vmem:[#allocation15 + $0x2b0] sm:$0xff]
    %v1393 = vld [vmem:[#allocation15 + $0x2b8] sm:$0xff]
    %v1394 = vld [vmem:[#allocation15 + $0x2c0] sm:$0xff]
    %v1395 = vld [vmem:[#allocation15 + $0x2c8] sm:$0xff]
    %v1396 = vld [vmem:[#allocation15 + $0x2d0] sm:$0xff]
    %v1397 = vld [vmem:[#allocation15 + $0x2d8] sm:$0xff]
    %v1398 = vld [vmem:[#allocation15 + $0x2e0] sm:$0xff]
    %v1399 = vld [vmem:[#allocation15 + $0x2e8] sm:$0xff]
    %v1400 = vld [vmem:[#allocation15 + $0x2f0] sm:$0xff]
    %v1401 = vld [vmem:[#allocation15 + $0x2f8] sm:$0xff]
    %v1402 = vld [vmem:[#allocation15 + $0x300] sm:$0xff]
    %v1403 = vld [vmem:[#allocation15 + $0x308] sm:$0xff]
    %v1404 = vld [vmem:[#allocation15 + $0x310] sm:$0xff]
    %v1405 = vld [vmem:[#allocation15 + $0x318] sm:$0xff]
    %v1406 = vld [vmem:[#allocation15 + $0x320] sm:$0xff]
    %v1407 = vld [vmem:[#allocation15 + $0x328] sm:$0xff]
    %v1408 = vld [vmem:[#allocation15 + $0x330] sm:$0xff]
    %v1409 = vld [vmem:[#allocation15 + $0x338] sm:$0xff]
    %v1410 = vld [vmem:[#allocation15 + $0x340] sm:$0xff]
    %v1411 = vld [vmem:[#allocation15 + $0x348] sm:$0xff]
    %v1412 = vld [vmem:[#allocation15 + $0x350] sm:$0xff]
    %v1413 = vld [vmem:[#allocation15 + $0x358] sm:$0xff]
    %v1414 = vld [vmem:[#allocation15 + $0x360] sm:$0xff]
    %v1415 = vld [vmem:[#allocation15 + $0x368] sm:$0xff]
    %v1416 = vld [vmem:[#allocation15 + $0x370] sm:$0xff]
    %v1417 = vld [vmem:[#allocation15 + $0x378] sm:$0xff]
    %v1418 = vld [vmem:[#allocation15 + $0x380] sm:$0xff]
    %v1419 = vld [vmem:[#allocation15 + $0x388] sm:$0xff]
    %v1420 = vld [vmem:[#allocation15 + $0x390] sm:$0xff]
    %v1421 = vld [vmem:[#allocation15 + $0x398] sm:$0xff]
    %v1422 = vld [vmem:[#allocation15 + $0x3a0] sm:$0xff]
    %v1423 = vld [vmem:[#allocation15 + $0x3a8] sm:$0xff]
    %v1424 = vld [vmem:[#allocation15 + $0x3b0] sm:$0xff]
    %v1425 = vld [vmem:[#allocation15 + $0x3b8] sm:$0xff]
    %v1426 = vld [vmem:[#allocation15 + $0x3c0] sm:$0xff]
    %v1427 = vld [vmem:[#allocation15 + $0x3c8] sm:$0xff]
    %v1428 = vld [vmem:[#allocation15 + $0x3d0] sm:$0xff]
    %v1429 = vld [vmem:[#allocation15 + $0x3d8] sm:$0xff]
    %v1430 = vld [vmem:[#allocation15 + $0x3e0] sm:$0xff]
    %v1431 = vld [vmem:[#allocation15 + $0x3e8] sm:$0xff]
    %v1432 = vld [vmem:[#allocation15 + $0x3f0] sm:$0xff]
    %v1433 = vld [vmem:[#allocation15 + $0x3f8] sm:$0xff]
    %v1434 = vld [vmem:[#allocation15 + $0x400] sm:$0xff]
    %v1435 = vld [vmem:[#allocation15 + $0x408] sm:$0xff]
    %v1436 = vld [vmem:[#allocation15 + $0x410] sm:$0xff]
    %v1437 = vld [vmem:[#allocation15 + $0x418] sm:$0xff]
    %v1438 = vld [vmem:[#allocation15 + $0x420] sm:$0xff]
    %v1439 = vld [vmem:[#allocation15 + $0x428] sm:$0xff]
    %v1440 = vld [vmem:[#allocation15 + $0x430] sm:$0xff]
    %v1441 = vld [vmem:[#allocation15 + $0x438] sm:$0xff]
    %v1442 = vld [vmem:[#allocation15 + $0x440] sm:$0xff]
    %v1443 = vld [vmem:[#allocation15 + $0x448] sm:$0xff]
    %v1444 = vld [vmem:[#allocation15 + $0x450] sm:$0xff]
    %v1445 = vld [vmem:[#allocation15 + $0x458] sm:$0xff]
    %v1446 = vld [vmem:[#allocation15 + $0x460] sm:$0xff]
    %v1447 = vld [vmem:[#allocation15 + $0x468] sm:$0xff]
    %v1448 = vld [vmem:[#allocation15 + $0x470] sm:$0xff]
    %v1449 = vld [vmem:[#allocation15 + $0x478] sm:$0xff]
    %v1450 = vld [vmem:[#allocation15 + $0x480] sm:$0xff]
    %v1451 = vld [vmem:[#allocation15 + $0x488] sm:$0xff]
    %v1452 = vld [vmem:[#allocation15 + $0x490] sm:$0xff]
    %v1453 = vld [vmem:[#allocation15 + $0x498] sm:$0xff]
    %v1454 = vld [vmem:[#allocation15 + $0x4a0] sm:$0xff]
    %v1455 = vld [vmem:[#allocation15 + $0x4a8] sm:$0xff]
    %v1456 = vld [vmem:[#allocation15 + $0x4b0] sm:$0xff]
    %v1457 = vld [vmem:[#allocation15 + $0x4b8] sm:$0xff]
    %v1458 = vld [vmem:[#allocation15 + $0x4c0] sm:$0xff]
    %v1459 = vld [vmem:[#allocation15 + $0x4c8] sm:$0xff]
    %v1460 = vld [vmem:[#allocation15 + $0x4d0] sm:$0xff]
    %v1461 = vld [vmem:[#allocation15 + $0x4d8] sm:$0xff]
    %v1462 = vld [vmem:[#allocation15 + $0x4e0] sm:$0xff]
    %v1463 = vld [vmem:[#allocation15 + $0x4e8] sm:$0xff]
    %v1464 = vld [vmem:[#allocation15 + $0x4f0] sm:$0xff]
    %v1465 = vld [vmem:[#allocation15 + $0x4f8] sm:$0xff]
    %v1466 = vld [vmem:[#allocation15 + $0x500] sm:$0xff]
    %v1467 = vld [vmem:[#allocation15 + $0x508] sm:$0xff]
    %v1468 = vld [vmem:[#allocation15 + $0x510] sm:$0xff]
    %v1469 = vld [vmem:[#allocation15 + $0x518] sm:$0xff]
    %v1470 = vld [vmem:[#allocation15 + $0x520] sm:$0xff]
    %v1471 = vld [vmem:[#allocation15 + $0x528] sm:$0xff]
    %v1472 = vld [vmem:[#allocation15 + $0x530] sm:$0xff]
    %v1473 = vld [vmem:[#allocation15 + $0x538] sm:$0xff]
    %v1474 = vld [vmem:[#allocation15 + $0x540] sm:$0xff]
    %v1475 = vld [vmem:[#allocation15 + $0x548] sm:$0xff]
    %v1476 = vld [vmem:[#allocation15 + $0x550] sm:$0xff]
    %v1477 = vld [vmem:[#allocation15 + $0x558] sm:$0xff]
    %v1478 = vld [vmem:[#allocation15 + $0x560] sm:$0xff]
    %v1479 = vld [vmem:[#allocation15 + $0x568] sm:$0xff]
    %v1480 = vld [vmem:[#allocation15 + $0x570] sm:$0xff]
    %v1481 = vld [vmem:[#allocation15 + $0x578] sm:$0xff]
    %v1482 = vld [vmem:[#allocation15 + $0x580] sm:$0xff]
    %v1483 = vld [vmem:[#allocation15 + $0x588] sm:$0xff]
    %v1484 = vld [vmem:[#allocation15 + $0x590] sm:$0xff]
    %v1485 = vld [vmem:[#allocation15 + $0x598] sm:$0xff]
    %v1486 = vld [vmem:[#allocation15 + $0x5a0] sm:$0xff]
    %v1487 = vld [vmem:[#allocation15 + $0x5a8] sm:$0xff]
    %v1488 = vld [vmem:[#allocation15 + $0x5b0] sm:$0xff]
    %v1489 = vld [vmem:[#allocation15 + $0x5b8] sm:$0xff]
    %v1490 = vld [vmem:[#allocation15 + $0x5c0] sm:$0xff]
    %v1491 = vld [vmem:[#allocation15 + $0x5c8] sm:$0xff]
    %v1492 = vld [vmem:[#allocation15 + $0x5d0] sm:$0xff]
    %v1493 = vld [vmem:[#allocation15 + $0x5d8] sm:$0xff]
    %v1494 = vld [vmem:[#allocation15 + $0x5e0] sm:$0xff]
    %v1495 = vld [vmem:[#allocation15 + $0x5e8] sm:$0xff]
    %v1496 = vld [vmem:[#allocation15 + $0x5f0] sm:$0xff]
    %v1497 = vld [vmem:[#allocation15 + $0x5f8] sm:$0xff]
    %v1498 = vld [vmem:[#allocation15 + $0x600] sm:$0xff]
    %v1499 = vld [vmem:[#allocation15 + $0x608] sm:$0xff]
    %v1500 = vld [vmem:[#allocation15 + $0x610] sm:$0xff]
    %v1501 = vld [vmem:[#allocation15 + $0x618] sm:$0xff]
    %v1502 = vld [vmem:[#allocation15 + $0x620] sm:$0xff]
    %v1503 = vld [vmem:[#allocation15 + $0x628] sm:$0xff]
    %v1504 = vld [vmem:[#allocation15 + $0x630] sm:$0xff]
    %v1505 = vld [vmem:[#allocation15 + $0x638] sm:$0xff]
    %v1506 = vld [vmem:[#allocation15 + $0x640] sm:$0xff]
    %v1507 = vld [vmem:[#allocation15 + $0x648] sm:$0xff]
    %v1508 = vld [vmem:[#allocation15 + $0x650] sm:$0xff]
    %v1509 = vld [vmem:[#allocation15 + $0x658] sm:$0xff]
    %v1510 = vld [vmem:[#allocation15 + $0x660] sm:$0xff]
    %v1511 = vld [vmem:[#allocation15 + $0x668] sm:$0xff]
    %v1512 = vld [vmem:[#allocation15 + $0x670] sm:$0xff]
    %v1513 = vld [vmem:[#allocation15 + $0x678] sm:$0xff]
    %v1514 = vld [vmem:[#allocation15 + $0x680] sm:$0xff]
    %v1515 = vld [vmem:[#allocation15 + $0x688] sm:$0xff]
    %v1516 = vld [vmem:[#allocation15 + $0x690] sm:$0xff]
    %v1517 = vld [vmem:[#allocation15 + $0x698] sm:$0xff]
    %v1518 = vld [vmem:[#allocation15 + $0x6a0] sm:$0xff]
    %v1519 = vld [vmem:[#allocation15 + $0x6a8] sm:$0xff]
    %v1520 = vld [vmem:[#allocation15 + $0x6b0] sm:$0xff]
    %v1521 = vld [vmem:[#allocation15 + $0x6b8] sm:$0xff]
    %v1522 = vld [vmem:[#allocation15 + $0x6c0] sm:$0xff]
    %v1523 = vld [vmem:[#allocation15 + $0x6c8] sm:$0xff]
    %v1524 = vld [vmem:[#allocation15 + $0x6d0] sm:$0xff]
    %v1525 = vld [vmem:[#allocation15 + $0x6d8] sm:$0xff]
    %v1526 = vld [vmem:[#allocation15 + $0x6e0] sm:$0xff]
    %v1527 = vld [vmem:[#allocation15 + $0x6e8] sm:$0xff]
    %v1528 = vld [vmem:[#allocation15 + $0x6f0] sm:$0xff]
    %v1529 = vld [vmem:[#allocation15 + $0x6f8] sm:$0xff]
    %v1530 = vld [vmem:[#allocation15 + $0x700] sm:$0xff]
    %v1531 = vld [vmem:[#allocation15 + $0x708] sm:$0xff]
    %v1532 = vld [vmem:[#allocation15 + $0x710] sm:$0xff]
    %v1533 = vld [vmem:[#allocation15 + $0x718] sm:$0xff]
    %v1534 = vld [vmem:[#allocation15 + $0x720] sm:$0xff]
    %v1535 = vld [vmem:[#allocation15 + $0x728] sm:$0xff]
    %v1536 = vld [vmem:[#allocation15 + $0x730] sm:$0xff]
    %v1537 = vld [vmem:[#allocation15 + $0x738] sm:$0xff]
    %v1538 = vld [vmem:[#allocation15 + $0x740] sm:$0xff]
    %v1539 = vld [vmem:[#allocation15 + $0x748] sm:$0xff]
    %v1540 = vld [vmem:[#allocation15 + $0x750] sm:$0xff]
    %v1541 = vld [vmem:[#allocation15 + $0x758] sm:$0xff]
    %v1542 = vld [vmem:[#allocation15 + $0x760] sm:$0xff]
    %v1543 = vld [vmem:[#allocation15 + $0x768] sm:$0xff]
    %v1544 = vld [vmem:[#allocation15 + $0x770] sm:$0xff]
    %v1545 = vld [vmem:[#allocation15 + $0x778] sm:$0xff]
    %v1546 = vld [vmem:[#allocation15 + $0x780] sm:$0xff]
    %v1547 = vld [vmem:[#allocation15 + $0x788] sm:$0xff]
    %v1548 = vld [vmem:[#allocation15 + $0x790] sm:$0xff]
    %v1549 = vld [vmem:[#allocation15 + $0x798] sm:$0xff]
    %v1550 = vld [vmem:[#allocation15 + $0x7a0] sm:$0xff]
    %v1551 = vld [vmem:[#allocation15 + $0x7a8] sm:$0xff]
    %v1552 = vld [vmem:[#allocation15 + $0x7b0] sm:$0xff]
    %v1553 = vld [vmem:[#allocation15 + $0x7b8] sm:$0xff]
    %v1554 = vld [vmem:[#allocation15 + $0x7c0] sm:$0xff]
    %v1555 = vld [vmem:[#allocation15 + $0x7c8] sm:$0xff]
    %v1556 = vld [vmem:[#allocation15 + $0x7d0] sm:$0xff]
    %v1557 = vld [vmem:[#allocation15 + $0x7d8] sm:$0xff]
    %v1558 = vld [vmem:[#allocation15 + $0x7e0] sm:$0xff]
    %v1559 = vld [vmem:[#allocation15 + $0x7e8] sm:$0xff]
    %v1560 = vld [vmem:[#allocation15 + $0x7f0] sm:$0xff]
    %v1561 = vld [vmem:[#allocation15 + $0x7f8] sm:$0xff]
    %v1562 = vld [vmem:[#allocation15 + $0x800] sm:$0xff]
    %v1563 = vld [vmem:[#allocation15 + $0x808] sm:$0xff]
    %v1564 = vld [vmem:[#allocation15 + $0x810] sm:$0xff]
    %v1565 = vld [vmem:[#allocation15 + $0x818] sm:$0xff]
    %v1566 = vld [vmem:[#allocation15 + $0x820] sm:$0xff]
    %v1567 = vld [vmem:[#allocation15 + $0x828] sm:$0xff]
    %v1568 = vld [vmem:[#allocation15 + $0x830] sm:$0xff]
    %v1569 = vld [vmem:[#allocation15 + $0x838] sm:$0xff]
    %v1570 = vld [vmem:[#allocation15 + $0x840] sm:$0xff]
    %v1571 = vld [vmem:[#allocation15 + $0x848] sm:$0xff]
    %v1572 = vld [vmem:[#allocation15 + $0x850] sm:$0xff]
    %v1573 = vld [vmem:[#allocation15 + $0x858] sm:$0xff]
    %v1574 = vld [vmem:[#allocation15 + $0x860] sm:$0xff]
    %v1575 = vld [vmem:[#allocation15 + $0x868] sm:$0xff]
    %v1576 = vld [vmem:[#allocation15 + $0x870] sm:$0xff]
    %v1577 = vld [vmem:[#allocation15 + $0x878] sm:$0xff]
    %v1578 = vld [vmem:[#allocation15 + $0x880] sm:$0xff]
    %v1579 = vld [vmem:[#allocation15 + $0x888] sm:$0xff]
    %v1580 = vld [vmem:[#allocation15 + $0x890] sm:$0xff]
    %v1581 = vld [vmem:[#allocation15 + $0x898] sm:$0xff]
    %v1582 = vld [vmem:[#allocation15 + $0x8a0] sm:$0xff]
    %v1583 = vld [vmem:[#allocation15 + $0x8a8] sm:$0xff]
    %v1584 = vld [vmem:[#allocation15 + $0x8b0] sm:$0xff]
    %v1585 = vld [vmem:[#allocation15 + $0x8b8] sm:$0xff]
    %v1586 = vld [vmem:[#allocation15 + $0x8c0] sm:$0xff]
    %v1587 = vld [vmem:[#allocation15 + $0x8c8] sm:$0xff]
    %v1588 = vld [vmem:[#allocation15 + $0x8d0] sm:$0xff]
    %v1589 = vld [vmem:[#allocation15 + $0x8d8] sm:$0xff]
    %v1590 = vld [vmem:[#allocation15 + $0x8e0] sm:$0xff]
    %v1591 = vld [vmem:[#allocation15 + $0x8e8] sm:$0xff]
    %v1592 = vld [vmem:[#allocation15 + $0x8f0] sm:$0xff]
    %v1593 = vld [vmem:[#allocation15 + $0x8f8] sm:$0xff]
    %1594 = vmatprep.subr.mxu0 %v1307
    %1595 = vmatpush1.msra.mxu0 %v1306
    %1596 = vmatprep.subr.mxu0 %v1309
    %1597 = vmatpush1.msra.mxu0 %v1308
    %1598 = vmatprep.subr.mxu0 %v1311
    %1599 = vmatpush1.msra.mxu0 %v1310
    %1600 = vmatprep.subr.mxu0 %v1313
    %1601 = vmatpush1.msra.mxu0 %v1312
    %1602 = vmatprep.subr.mxu0 %v1315
    %1603 = vmatpush1.msra.mxu0 %v1314
    %1604 = vmatprep.subr.mxu0 %v1317
    %1605 = vmatpush1.msra.mxu0 %v1316
    %1606 = vmatprep.subr.mxu0 %v1319
    %1607 = vmatpush1.msra.mxu0 %v1318
    %1608 = vmatprep.subr.mxu0 %v1321
    %1609 = vmatpush1.msra.mxu0 %v1320
    %1610 = vmatprep.subr.mxu0 %v1323
    %1611 = vmatpush1.msra.mxu0 %v1322
    %1612 = vmatprep.subr.mxu0 %v1325
    %1613 = vmatpush1.msra.mxu0 %v1324
    %1614 = vmatprep.subr.mxu0 %v1327
    %1615 = vmatpush1.msra.mxu0 %v1326
    %1616 = vmatprep.subr.mxu0 %v1329
    %1617 = vmatpush1.msra.mxu0 %v1328
    %1618 = vmatprep.subr.mxu0 %v1331
    %1619 = vmatpush1.msra.mxu0 %v1330
    %1620 = vmatprep.subr.mxu0 %v1333
    %1621 = vmatpush1.msra.mxu0 %v1332
    %1622 = vmatprep.subr.mxu0 %v1335
    %1623 = vmatpush1.msra.mxu0 %v1334
    %1624 = vmatprep.subr.mxu0 %v1337
    %1625 = vmatpush1.msra.mxu0 %v1336
    %1626 = vmatprep.subr.mxu0 %v1339
    %1627 = vmatpush1.msra.mxu0 %v1338
    %1628 = vmatprep.subr.mxu0 %v1341
    %1629 = vmatpush1.msra.mxu0 %v1340
    %1630 = vmatprep.subr.mxu0 %v1343
    %1631 = vmatpush1.msra.mxu0 %v1342
    %1632 = vmatprep.subr.mxu0 %v1345
    %1633 = vmatpush1.msra.mxu0 %v1344
    %1634 = vmatprep.subr.mxu0 %v1347
    %1635 = vmatpush1.msra.mxu0 %v1346
    %1636 = vmatprep.subr.mxu0 %v1349
    %1637 = vmatpush1.msra.mxu0 %v1348
    %1638 = vmatprep.subr.mxu0 %v1351
    %1639 = vmatpush1.msra.mxu0 %v1350
    %1640 = vmatprep.subr.mxu0 %v1353
    %1641 = vmatpush1.msra.mxu0 %v1352
    %1642 = vmatprep.subr.mxu0 %v1355
    %1643 = vmatpush1.msra.mxu0 %v1354
    %1644 = vmatprep.subr.mxu0 %v1357
    %1645 = vmatpush1.msra.mxu0 %v1356
    %1646 = vmatprep.subr.mxu0 %v1359
    %1647 = vmatpush1.msra.mxu0 %v1358
    %1648 = vmatprep.subr.mxu0 %v1361
    %1649 = vmatpush1.msra.mxu0 %v1360
    %1650 = vmatprep.subr.mxu0 %v1363
    %1651 = vmatpush1.msra.mxu0 %v1362
    %1652 = vmatprep.subr.mxu0 %v1365
    %1653 = vmatpush1.msra.mxu0 %v1364
    %1654 = vmatprep.subr.mxu0 %v1367
    %1655 = vmatpush1.msra.mxu0 %v1366
    %1656 = vmatprep.subr.mxu0 %v1369
    %1657 = vmatpush1.msra.mxu0 %v1368
    %1658 = vmatprep.mubr.f32.mxu0 %v1274
    %1659 = vmatmul.mubr.f32.gmra.mrb[0].mxu0 %v1273
    %v1660 = vpop.f32.mrb[0].mxu0
    %v1661 = vadd.f32 0.0, %v1660
    %v1662 = vpop.f32.mrb[0].mxu0
    %v1663 = vadd.f32 0.0, %v1662
    %1664 = vdwg.mxu0
    %1665 = vmatprep.subr.mxu0 %v1371
    %1666 = vmatpush1.msra.mxu0 %v1370
    %1667 = vmatprep.subr.mxu0 %v1373
    %1668 = vmatpush1.msra.mxu0 %v1372
    %1669 = vmatprep.subr.mxu0 %v1375
    %1670 = vmatpush1.msra.mxu0 %v1374
    %1671 = vmatprep.subr.mxu0 %v1377
    %1672 = vmatpush1.msra.mxu0 %v1376
    %1673 = vmatprep.subr.mxu0 %v1379
    %1674 = vmatpush1.msra.mxu0 %v1378
    %1675 = vmatprep.subr.mxu0 %v1381
    %1676 = vmatpush1.msra.mxu0 %v1380
    %1677 = vmatprep.subr.mxu0 %v1383
    %1678 = vmatpush1.msra.mxu0 %v1382
    %1679 = vmatprep.subr.mxu0 %v1385
    %1680 = vmatpush1.msra.mxu0 %v1384
    %1681 = vmatprep.subr.mxu0 %v1387
    %1682 = vmatpush1.msra.mxu0 %v1386
    %1683 = vmatprep.subr.mxu0 %v1389
    %1684 = vmatpush1.msra.mxu0 %v1388
    %1685 = vmatprep.subr.mxu0 %v1391
    %1686 = vmatpush1.msra.mxu0 %v1390
    %1687 = vmatprep.subr.mxu0 %v1393
    %1688 = vmatpush1.msra.mxu0 %v1392
    %1689 = vmatprep.subr.mxu0 %v1395
    %1690 = vmatpush1.msra.mxu0 %v1394
    %1691 = vmatprep.subr.mxu0 %v1397
    %1692 = vmatpush1.msra.mxu0 %v1396
    %1693 = vmatprep.subr.mxu0 %v1399
    %1694 = vmatpush1.msra.mxu0 %v1398
    %1695 = vmatprep.subr.mxu0 %v1401
    %1696 = vmatpush1.msra.mxu0 %v1400
    %1697 = vmatprep.subr.mxu0 %v1403
    %1698 = vmatpush1.msra.mxu0 %v1402
    %1699 = vmatprep.subr.mxu0 %v1405
    %1700 = vmatpush1.msra.mxu0 %v1404
    %1701 = vmatprep.subr.mxu0 %v1407
    %1702 = vmatpush1.msra.mxu0 %v1406
    %1703 = vmatprep.subr.mxu0 %v1409
    %1704 = vmatpush1.msra.mxu0 %v1408
    %1705 = vmatprep.subr.mxu0 %v1411
    %1706 = vmatpush1.msra.mxu0 %v1410
    %1707 = vmatprep.subr.mxu0 %v1413
    %1708 = vmatpush1.msra.mxu0 %v1412
    %1709 = vmatprep.subr.mxu0 %v1415
    %1710 = vmatpush1.msra.mxu0 %v1414
    %1711 = vmatprep.subr.mxu0 %v1417
    %1712 = vmatpush1.msra.mxu0 %v1416
    %1713 = vmatprep.subr.mxu0 %v1419
    %1714 = vmatpush1.msra.mxu0 %v1418
    %1715 = vmatprep.subr.mxu0 %v1421
    %1716 = vmatpush1.msra.mxu0 %v1420
    %1717 = vmatprep.subr.mxu0 %v1423
    %1718 = vmatpush1.msra.mxu0 %v1422
    %1719 = vmatprep.subr.mxu0 %v1425
    %1720 = vmatpush1.msra.mxu0 %v1424
    %1721 = vmatprep.subr.mxu0 %v1427
    %1722 = vmatpush1.msra.mxu0 %v1426
    %1723 = vmatprep.subr.mxu0 %v1429
    %1724 = vmatpush1.msra.mxu0 %v1428
    %1725 = vmatprep.subr.mxu0 %v1431
    %1726 = vmatpush1.msra.mxu0 %v1430
    %1727 = vmatprep.subr.mxu0 %v1433
    %1728 = vmatpush1.msra.mxu0 %v1432
    %1729 = vmatprep.mubr.f32.mxu0 %v1294
    %1730 = vmatmul.mubr.f32.gmra.mrb[0].mxu0 %v1275
    %v1731 = vpop.f32.mrb[0].mxu0
    %v1732 = vadd.f32 %v1661, %v1731
    %v1733 = vpop.f32.mrb[0].mxu0
    %v1734 = vadd.f32 %v1663, %v1733
    %1735 = vdwg.mxu0
    %1736 = vmatprep.subr.mxu0 %v1435
    %1737 = vmatpush1.msra.mxu0 %v1434
    %1738 = vmatprep.subr.mxu0 %v1437
    %1739 = vmatpush1.msra.mxu0 %v1436
    %1740 = vmatprep.subr.mxu0 %v1439
    %1741 = vmatpush1.msra.mxu0 %v1438
    %1742 = vmatprep.subr.mxu0 %v1441
    %1743 = vmatpush1.msra.mxu0 %v1440
    %1744 = vmatprep.subr.mxu0 %v1443
    %1745 = vmatpush1.msra.mxu0 %v1442
    %1746 = vmatprep.subr.mxu0 %v1445
    %1747 = vmatpush1.msra.mxu0 %v1444
    %1748 = vmatprep.subr.mxu0 %v1447
    %1749 = vmatpush1.msra.mxu0 %v1446
    %1750 = vmatprep.subr.mxu0 %v1449
    %1751 = vmatpush1.msra.mxu0 %v1448
    %1752 = vmatprep.subr.mxu0 %v1451
    %1753 = vmatpush1.msra.mxu0 %v1450
    %1754 = vmatprep.subr.mxu0 %v1453
    %1755 = vmatpush1.msra.mxu0 %v1452
    %1756 = vmatprep.subr.mxu0 %v1455
    %1757 = vmatpush1.msra.mxu0 %v1454
    %1758 = vmatprep.subr.mxu0 %v1457
    %1759 = vmatpush1.msra.mxu0 %v1456
    %1760 = vmatprep.subr.mxu0 %v1459
    %1761 = vmatpush1.msra.mxu0 %v1458
    %1762 = vmatprep.subr.mxu0 %v1461
    %1763 = vmatpush1.msra.mxu0 %v1460
    %1764 = vmatprep.subr.mxu0 %v1463
    %1765 = vmatpush1.msra.mxu0 %v1462
    %1766 = vmatprep.subr.mxu0 %v1465
    %1767 = vmatpush1.msra.mxu0 %v1464
    %1768 = vmatprep.subr.mxu0 %v1467
    %1769 = vmatpush1.msra.mxu0 %v1466
    %1770 = vmatprep.subr.mxu0 %v1469
    %1771 = vmatpush1.msra.mxu0 %v1468
    %1772 = vmatprep.subr.mxu0 %v1471
    %1773 = vmatpush1.msra.mxu0 %v1470
    %1774 = vmatprep.subr.mxu0 %v1473
    %1775 = vmatpush1.msra.mxu0 %v1472
    %1776 = vmatprep.subr.mxu0 %v1475
    %1777 = vmatpush1.msra.mxu0 %v1474
    %1778 = vmatprep.subr.mxu0 %v1477
    %1779 = vmatpush1.msra.mxu0 %v1476
    %1780 = vmatprep.subr.mxu0 %v1479
    %1781 = vmatpush1.msra.mxu0 %v1478
    %1782 = vmatprep.subr.mxu0 %v1481
    %1783 = vmatpush1.msra.mxu0 %v1480
    %1784 = vmatprep.subr.mxu0 %v1483
    %1785 = vmatpush1.msra.mxu0 %v1482
    %1786 = vmatprep.subr.mxu0 %v1485
    %1787 = vmatpush1.msra.mxu0 %v1484
    %1788 = vmatprep.subr.mxu0 %v1487
    %1789 = vmatpush1.msra.mxu0 %v1486
    %1790 = vmatprep.subr.mxu0 %v1489
    %1791 = vmatpush1.msra.mxu0 %v1488
    %1792 = vmatprep.subr.mxu0 %v1491
    %1793 = vmatpush1.msra.mxu0 %v1490
    %1794 = vmatprep.subr.mxu0 %v1493
    %1795 = vmatpush1.msra.mxu0 %v1492
    %1796 = vmatprep.subr.mxu0 %v1495
    %1797 = vmatpush1.msra.mxu0 %v1494
    %1798 = vmatprep.subr.mxu0 %v1497
    %1799 = vmatpush1.msra.mxu0 %v1496
    %1800 = vmatprep.mubr.f32.mxu0 %v1296
    %1801 = vmatmul.mubr.f32.gmra.mrb[0].mxu0 %v1295
    %v1802 = vpop.f32.mrb[0].mxu0
    %v1803 = vadd.f32 %v1732, %v1802
    %v1804 = vpop.f32.mrb[0].mxu0
    %v1805 = vadd.f32 %v1734, %v1804
    %1806 = vdwg.mxu0
    %1807 = vmatprep.subr.mxu0 %v1499
    %1808 = vmatpush1.msra.mxu0 %v1498
    %1809 = vmatprep.subr.mxu0 %v1501
    %1810 = vmatpush1.msra.mxu0 %v1500
    %1811 = vmatprep.subr.mxu0 %v1503
    %1812 = vmatpush1.msra.mxu0 %v1502
    %1813 = vmatprep.subr.mxu0 %v1505
    %1814 = vmatpush1.msra.mxu0 %v1504
    %1815 = vmatprep.subr.mxu0 %v1507
    %1816 = vmatpush1.msra.mxu0 %v1506
    %1817 = vmatprep.subr.mxu0 %v1509
    %1818 = vmatpush1.msra.mxu0 %v1508
    %1819 = vmatprep.subr.mxu0 %v1511
    %1820 = vmatpush1.msra.mxu0 %v1510
    %1821 = vmatprep.subr.mxu0 %v1513
    %1822 = vmatpush1.msra.mxu0 %v1512
    %1823 = vmatprep.subr.mxu0 %v1515
    %1824 = vmatpush1.msra.mxu0 %v1514
    %1825 = vmatprep.subr.mxu0 %v1517
    %1826 = vmatpush1.msra.mxu0 %v1516
    %1827 = vmatprep.subr.mxu0 %v1519
    %1828 = vmatpush1.msra.mxu0 %v1518
    %1829 = vmatprep.subr.mxu0 %v1521
    %1830 = vmatpush1.msra.mxu0 %v1520
    %1831 = vmatprep.subr.mxu0 %v1523
    %1832 = vmatpush1.msra.mxu0 %v1522
    %1833 = vmatprep.subr.mxu0 %v1525
    %1834 = vmatpush1.msra.mxu0 %v1524
    %1835 = vmatprep.subr.mxu0 %v1527
    %1836 = vmatpush1.msra.mxu0 %v1526
    %1837 = vmatprep.subr.mxu0 %v1529
    %1838 = vmatpush1.msra.mxu0 %v1528
    %1839 = vmatprep.subr.mxu0 %v1531
    %1840 = vmatpush1.msra.mxu0 %v1530
    %1841 = vmatprep.subr.mxu0 %v1533
    %1842 = vmatpush1.msra.mxu0 %v1532
    %1843 = vmatprep.subr.mxu0 %v1535
    %1844 = vmatpush1.msra.mxu0 %v1534
    %1845 = vmatprep.subr.mxu0 %v1537
    %1846 = vmatpush1.msra.mxu0 %v1536
    %1847 = vmatprep.subr.mxu0 %v1539
    %1848 = vmatpush1.msra.mxu0 %v1538
    %1849 = vmatprep.subr.mxu0 %v1541
    %1850 = vmatpush1.msra.mxu0 %v1540
    %1851 = vmatprep.subr.mxu0 %v1543
    %1852 = vmatpush1.msra.mxu0 %v1542
    %1853 = vmatprep.subr.mxu0 %v1545
    %1854 = vmatpush1.msra.mxu0 %v1544
    %1855 = vmatprep.subr.mxu0 %v1547
    %1856 = vmatpush1.msra.mxu0 %v1546
    %1857 = vmatprep.subr.mxu0 %v1549
    %1858 = vmatpush1.msra.mxu0 %v1548
    %1859 = vmatprep.subr.mxu0 %v1551
    %1860 = vmatpush1.msra.mxu0 %v1550
    %1861 = vmatprep.subr.mxu0 %v1553
    %1862 = vmatpush1.msra.mxu0 %v1552
    %1863 = vmatprep.subr.mxu0 %v1555
    %1864 = vmatpush1.msra.mxu0 %v1554
    %1865 = vmatprep.subr.mxu0 %v1557
    %1866 = vmatpush1.msra.mxu0 %v1556
    %1867 = vmatprep.subr.mxu0 %v1559
    %1868 = vmatpush1.msra.mxu0 %v1558
    %1869 = vmatprep.subr.mxu0 %v1561
    %1870 = vmatpush1.msra.mxu0 %v1560
    %1871 = vmatprep.mubr.f32.mxu0 %v1302
    %1872 = vmatmul.mubr.f32.gmra.mrb[0].mxu0 %v1299
    %v1873 = vpop.f32.mrb[0].mxu0
    %v1874 = vadd.f32 %v1803, %v1873
    %v1875 = vpop.f32.mrb[0].mxu0
    %v1876 = vadd.f32 %v1805, %v1875
    %1877 = vdwg.mxu0
    %1878 = vmatprep.subr.mxu0 %v1563
    %1879 = vmatpush1.msra.mxu0 %v1562
    %1880 = vmatprep.subr.mxu0 %v1565
    %1881 = vmatpush1.msra.mxu0 %v1564
    %1882 = vmatprep.subr.mxu0 %v1567
    %1883 = vmatpush1.msra.mxu0 %v1566
    %1884 = vmatprep.subr.mxu0 %v1569
    %1885 = vmatpush1.msra.mxu0 %v1568
    %1886 = vmatprep.subr.mxu0 %v1571
    %1887 = vmatpush1.msra.mxu0 %v1570
    %1888 = vmatprep.subr.mxu0 %v1573
    %1889 = vmatpush1.msra.mxu0 %v1572
    %1890 = vmatprep.subr.mxu0 %v1575
    %1891 = vmatpush1.msra.mxu0 %v1574
    %1892 = vmatprep.subr.mxu0 %v1577
    %1893 = vmatpush1.msra.mxu0 %v1576
    %1894 = vmatprep.subr.mxu0 %v1579
    %1895 = vmatpush1.msra.mxu0 %v1578
    %1896 = vmatprep.subr.mxu0 %v1581
    %1897 = vmatpush1.msra.mxu0 %v1580
    %1898 = vmatprep.subr.mxu0 %v1583
    %1899 = vmatpush1.msra.mxu0 %v1582
    %1900 = vmatprep.subr.mxu0 %v1585
    %1901 = vmatpush1.msra.mxu0 %v1584
    %1902 = vmatprep.subr.mxu0 %v1587
    %1903 = vmatpush1.msra.mxu0 %v1586
    %1904 = vmatprep.subr.mxu0 %v1589
    %1905 = vmatpush1.msra.mxu0 %v1588
    %1906 = vmatprep.subr.mxu0 %v1591
    %1907 = vmatpush1.msra.mxu0 %v1590
    %1908 = vmatprep.subr.mxu0 %v1593
    %1909 = vmatpush1.msra.mxu0 %v1592
    %1910 = vmatprep.subr.mxu0 0.0
    %1911 = vmatpush1.msra.mxu0 0.0
    %1912 = vmatprep.subr.mxu0 0.0
    %1913 = vmatpush1.msra.mxu0 0.0
    %1914 = vmatprep.subr.mxu0 0.0
    %1915 = vmatpush1.msra.mxu0 0.0
    %1916 = vmatprep.subr.mxu0 0.0
    %1917 = vmatpush1.msra.mxu0 0.0
    %1918 = vmatprep.subr.mxu0 0.0
    %1919 = vmatpush1.msra.mxu0 0.0
    %1920 = vmatprep.subr.mxu0 0.0
    %1921 = vmatpush1.msra.mxu0 0.0
    %1922 = vmatprep.subr.mxu0 0.0
    %1923 = vmatpush1.msra.mxu0 0.0
    %1924 = vmatprep.subr.mxu0 0.0
    %1925 = vmatpush1.msra.mxu0 0.0
    %1926 = vmatprep.subr.mxu0 0.0
    %1927 = vmatpush1.msra.mxu0 0.0
    %1928 = vmatprep.subr.mxu0 0.0
    %1929 = vmatpush1.msra.mxu0 0.0
    %1930 = vmatprep.subr.mxu0 0.0
    %1931 = vmatpush1.msra.mxu0 0.0
    %1932 = vmatprep.subr.mxu0 0.0
    %1933 = vmatpush1.msra.mxu0 0.0
    %1934 = vmatprep.subr.mxu0 0.0
    %1935 = vmatpush1.msra.mxu0 0.0
    %1936 = vmatprep.subr.mxu0 0.0
    %1937 = vmatpush1.msra.mxu0 0.0
    %1938 = vmatprep.subr.mxu0 0.0
    %1939 = vmatpush1.msra.mxu0 0.0
    %1940 = vmatprep.subr.mxu0 0.0
    %1941 = vmatpush1.msra.mxu0 0.0
    %1942 = vmatprep.mubr.f32.mxu0 0.0
    %1943 = vmatmul.mubr.f32.gmra.mrb[0].mxu0 %v1305
    %v1944 = vpop.f32.mrb[0].mxu0
    %v1945 = vadd.f32 %v1874, %v1944
    %v1946 = vpop.f32.mrb[0].mxu0
    %v1947 = vadd.f32 %v1876, %v1946
    %1948 = vdwg.mxu0
    %1949 = vst [vmem:[%s11] sm:$0xff] %v1945
    %1950 = vst [vmem:[%s11 + $0x8] sm:$0xff] %v1947
    // Predicated region
    $region78: #{hand_hmr_forward.1} parent=1 // pred_check
      _
    $region79: #{hand_hmr_forward.1} parent=1 // pred_check_branch
      %1952 = sbr.rel (0) target = $region81
    $region80: #{hand_hmr_forward.1} parent=1 // pred_region
      _
    $region81: #{hand_hmr_forward.1} parent=1 // pred_fallthru
      _
    // Predicated region
    $region82: #{hand_hmr_forward.1} parent=1 // pred_check
      _
    $region83: #{hand_hmr_forward.1} parent=1 // pred_check_branch
      %1954 = sbr.rel (0) target = $region85
    $region84: #{hand_hmr_forward.1} parent=1 // pred_region
      _
    $region85: #{hand_hmr_forward.1} parent=1 // pred_fallthru
      _
    // Predicated region
    $region86: #{hand_hmr_forward.1} parent=1 // pred_check
      _
    $region87: #{hand_hmr_forward.1} parent=1 // pred_check_branch
      %1956 = sbr.rel (0) target = $region89
    $region88: #{hand_hmr_forward.1} parent=1 // pred_region
      _
    $region89: #{hand_hmr_forward.1} parent=1 // pred_fallthru
      _
    // Predicated region
    $region90: #{hand_hmr_forward.1} parent=1 // pred_check
      _
    $region91: #{hand_hmr_forward.1} parent=1 // pred_check_branch
      %1958 = sbr.rel (0) target = $region93
    $region92: #{hand_hmr_forward.1} parent=1 // pred_region
      _
    $region93: #{hand_hmr_forward.1} parent=1 // pred_fallthru
      _
    %1959 = vsyncpa [#allocation3], 1
    %1960 = vsyncpa [#allocation5], 1
    %1961 = vsyncpa [#allocation8], 1
    %1962 = vsyncpa [#allocation11], 1
    %1963 = vsyncpa [#allocation14], 1

</llo_original>
